<compile_context>
chip_gen: v6e
topology: v6e:2x2x1
jax: 0.10.0
libtpu: 0.0.40
codegen_flags: <defaults>
</compile_context>

<pallas_src>
import functools
import math

import numpy as np
import jax
import jax.numpy as jnp
from jax.experimental import pallas as pl
from jax.experimental.pallas import tpu as pltpu

EPS = 1e-5


def _conv_stats_kernel(x_ref, xh_ref, w_ref, mask_ref, conv_ref, stats_ref, *,
                       offsets):
    """Conv tile (as K*K shifted matmuls) + per-tile partial BN statistics."""
    r_tile = conv_ref.shape[1]

    # Streamed input tile + its 128-lane halo; all K*K taps are static shifted
    # views of this single VMEM-resident slab (im2col lives in VMEM, not HBM).
    x = jnp.concatenate([x_ref[...], xh_ref[...]], axis=1)   # (Cin, r_tile+128) bf16
    w = w_ref[...]                                           # (K*K, Cout, Cin) bf16

    acc = jnp.zeros(conv_ref.shape, jnp.float32)             # (Cout, r_tile) f32
    for t, off in enumerate(offsets):                        # K*K accumulating matmuls
        acc = acc + jnp.dot(w[t], x[:, off:off + r_tile],
                            preferred_element_type=jnp.float32)
    conv_ref[...] = acc

    # Partial BatchNorm statistics over *valid* output positions only (the
    # padded-coordinate formulation also computes some border/garbage columns).
    m = mask_ref[...]                                        # (1, r_tile) f32 0/1
    cm = acc * m
    s1 = jnp.sum(cm, axis=1, keepdims=True)                  # (Cout, 1)  sum
    s2 = jnp.sum(cm * acc, axis=1, keepdims=True)            # (Cout, 1)  sum of squares
    stats_ref[...] = jnp.concatenate([s1, s2], axis=1)[None] # (1, Cout, 2)


def _bn_apply_kernel(conv_ref, scale_ref, shift_ref, out_ref):
    """Folded BN epilogue: 2 VPU ops/element, all f32, lane-dense (R on lanes)."""
    out_ref[...] = conv_ref[...] * scale_ref[...] + shift_ref[...]


@functools.partial(jax.jit, static_argnames=("stride", "r_tile"))
def cb_forward(x, weight, gamma, beta, stride=1, r_tile=512):
    """x: (N, Cin, H, W) f32; weight: (Cout, Cin, K, K); gamma/beta: (Cout,).

    r_tile sizing: per grid step ~2 buffers x (Cin*2 + 4 + Cout*4) * r_tile bytes
    must stay well under the 32 MiB scoped-VMEM limit (v7x has 64 MiB physical).
    """
    N, Cin, H, W = x.shape
    Cout, _, k, _ = weight.shape
    pad = (k - 1) // 2                 # TODO(synk): assumes odd kSize like the PyTorch module
    Hp, Wp = H + 2 * pad, W + 2 * pad
    Ho = (Hp - k) // stride + 1
    Wo = (Wp - k) // stride + 1

    assert r_tile % 128 == 0
    max_off = (k - 1) * Wp + (k - 1)   # largest tap shift in flattened padded coords
    assert max_off <= 128, "128-lane halo requires (k-1)*(W+2*pad+1) <= 128"

    r_total = N * Hp * Wp              # dense padded-coordinate output columns
    num_tiles = pl.cdiv(r_total, r_tile)
    r_cols = num_tiles * r_tile

    # ---- glue: NCHW -> padded (Cin, R) slab; lane axis = flattened (n, i, j) ----
    xp = jnp.pad(x, ((0, 0), (0, 0), (pad, pad), (pad, pad)))          # (N,Cin,Hp,Wp)
    xT = xp.transpose(1, 0, 2, 3).reshape(Cin, r_total)
    xT = jnp.pad(xT, ((0, 0), (0, r_cols + 128 - r_total))).astype(jnp.bfloat16)
    # Weights tap-major: wT[t, co, ci] = weight[co, ci, kh, kw], t = kh*k + kw.
    wT = weight.transpose(2, 3, 0, 1).reshape(k * k, Cout, Cin).astype(jnp.bfloat16)
    offsets = tuple(kh * Wp + kw for kh in range(k) for kw in range(k))

    # Validity mask over padded-coordinate columns (for BN batch statistics).
    cols = jnp.arange(r_cols, dtype=jnp.int32)
    rem = cols % (Hp * Wp)
    ii = rem // Wp
    jj = rem % Wp
    valid = ((cols < r_total)
             & (ii % stride == 0) & (ii <= (Ho - 1) * stride)
             & (jj % stride == 0) & (jj <= (Wo - 1) * stride))
    mask = valid.astype(jnp.float32).reshape(1, r_cols)

    kernel = functools.partial(_conv_stats_kernel, offsets=offsets)
    conv, stats = pl.pallas_call(
        kernel,
        out_shape=(jax.ShapeDtypeStruct((Cout, r_cols), jnp.float32),
                   jax.ShapeDtypeStruct((num_tiles, Cout, 2), jnp.float32)),
        grid=(num_tiles,),
        in_specs=[
            pl.BlockSpec((Cin, r_tile), lambda i: (0, i)),                       # tile
            pl.BlockSpec((Cin, 128), lambda i: (0, (i + 1) * (r_tile // 128))),  # halo
            pl.BlockSpec((k * k, Cout, Cin), lambda i: (0, 0, 0)),               # weights
            pl.BlockSpec((1, r_tile), lambda i: (0, i)),                         # mask
        ],
        out_specs=(
            pl.BlockSpec((Cout, r_tile), lambda i: (0, i)),
            pl.BlockSpec((1, Cout, 2), lambda i: (i, 0, 0)),
        ),
        compiler_params=pltpu.CompilerParams(
            dimension_semantics=("parallel",),       # per-tile partial stats => megacore OK
            vmem_limit_bytes=32 * 1024 * 1024),
        cost_estimate=pl.CostEstimate(
            flops=2 * r_total * k * k * Cin * Cout,
            transcendentals=0,
            bytes_accessed=int(xT.size * 2 + wT.size * 2 + mask.size * 4
                               + Cout * r_cols * 4 + num_tiles * Cout * 2 * 4)),
    )(xT, xT, wT, mask)

    # ---- tiny cross-tile combine + BN parameter folding (plain JAX, f32) ----
    st = jnp.sum(stats, axis=0)                        # (Cout, 2)
    r_valid = N * Ho * Wo
    mean = st[:, 0] / r_valid
    var = jnp.maximum(st[:, 1] / r_valid - mean * mean, 0.0)   # biased batch var
    inv_std = jax.lax.rsqrt(var + EPS)
    scale = (gamma * inv_std).reshape(Cout, 1).astype(jnp.float32)
    shift = (beta - mean * gamma * inv_std).reshape(Cout, 1).astype(jnp.float32)

    out_rows = pl.pallas_call(
        _bn_apply_kernel,
        out_shape=jax.ShapeDtypeStruct((Cout, r_cols), jnp.float32),
        grid=(num_tiles,),
        in_specs=[
            pl.BlockSpec((Cout, r_tile), lambda i: (0, i)),
            pl.BlockSpec((Cout, 1), lambda i: (0, 0)),
            pl.BlockSpec((Cout, 1), lambda i: (0, 0)),
        ],
        out_specs=pl.BlockSpec((Cout, r_tile), lambda i: (0, i)),
        input_output_aliases={0: 0},                   # normalize in place over conv
        compiler_params=pltpu.CompilerParams(
            dimension_semantics=("parallel",),
            vmem_limit_bytes=32 * 1024 * 1024),
    )(conv, scale, shift)

    # ---- glue: padded-coordinate columns -> NCHW, drop invalid positions ----
    out = out_rows[:, :r_total].reshape(Cout, N, Hp, Wp)
    out = out[:, :, 0:(Ho - 1) * stride + 1:stride, 0:(Wo - 1) * stride + 1:stride]
    return out.transpose(1, 0, 2, 3)                   # (N, Cout, Ho, Wo)


if __name__ == "__main__":
    # Small shapes consistent with the module: nIn=4, nOut=8, kSize=3, stride=1.
    N, Cin, H, W = 2, 4, 16, 16
    Cout, K, stride = 8, 3, 1

    key = jax.random.PRNGKey(0)
    kx, kw, kg, kb = jax.random.split(key, 4)

    x = jax.random.normal(kx, (N, Cin, H, W), dtype=jnp.float32)

    # Deterministic parameter init (Conv2d kaiming-uniform-ish; BN affine params).
    fan_in = Cin * K * K
    bound = 1.0 / math.sqrt(fan_in)
    weight = jax.random.uniform(kw, (Cout, Cin, K, K), minval=-bound, maxval=bound,
                                dtype=jnp.float32)
    gamma = 1.0 + 0.1 * jax.random.normal(kg, (Cout,), dtype=jnp.float32)
    beta = 0.1 * jax.random.normal(kb, (Cout,), dtype=jnp.float32)

    out = cb_forward(x, weight, gamma, beta)
    out = jax.block_until_ready(out)

    # Reference: lax conv + batch-stat BN (training-mode forward).
    pad = (K - 1) // 2
    ref_conv = jax.lax.conv_general_dilated(
        x, weight, window_strides=(stride, stride),
        padding=[(pad, pad), (pad, pad)],
        dimension_numbers=("NCHW", "OIHW", "NCHW"))
    mu = ref_conv.mean(axis=(0, 2, 3), keepdims=True)
    var = ref_conv.var(axis=(0, 2, 3), keepdims=True)
    ref = (ref_conv - mu) / jnp.sqrt(var + EPS)
    ref = ref * gamma.reshape(1, Cout, 1, 1) + beta.reshape(1, Cout, 1, 1)

    assert out.shape == (N, Cout, H, W), out.shape
    np.testing.assert_allclose(np.asarray(out), np.asarray(ref), atol=5e-2, rtol=5e-2)

    print("KERNEL_OK")
</pallas_src>

<mosaic_0001>
module attributes {stable_mosaic.version = 11 : i64} {
  func.func @_conv_stats_kernel(%arg0: i32, %arg1: memref<4x512xbf16, #tpu.memory_space<vmem>>, %arg2: memref<4x128xbf16, #tpu.memory_space<vmem>>, %arg3: memref<9x8x4xbf16, #tpu.memory_space<vmem>>, %arg4: memref<1x512xf32, #tpu.memory_space<vmem>>, %arg5: memref<8x512xf32, #tpu.memory_space<vmem>>, %arg6: memref<1x8x2xf32, #tpu.memory_space<vmem>>) attributes {dimension_semantics = [#tpu.dimension_semantics<parallel>], iteration_bounds = array<i64: 2>, scalar_prefetch = 0 : i64, scratch_operands = 0 : i64, tpu.core_type = #tpu.core_type<tc>, window_params = [{transform_indices = @transform_0, window_bounds = array<i64: 4, 512>}, {transform_indices = @transform_1, window_bounds = array<i64: 4, 128>}, {pipeline_mode = #tpu.pipeline_mode<synchronous>, transform_indices = @transform_2, window_bounds = array<i64: 9, 8, 4>}, {transform_indices = @transform_3, window_bounds = array<i64: 1, 512>}, {transform_indices = @transform_4, window_bounds = array<i64: 8, 512>}, {transform_indices = @transform_5, window_bounds = array<i64: 1, 8, 2>}]} {
    %c0 = arith.constant 0 : index
    %c0_0 = arith.constant 0 : index
    %0 = vector.load %arg1[%c0, %c0_0] : memref<4x512xbf16, #tpu.memory_space<vmem>>, vector<4x512xbf16>
    %c0_1 = arith.constant 0 : index
    %c0_2 = arith.constant 0 : index
    %1 = vector.load %arg2[%c0_1, %c0_2] : memref<4x128xbf16, #tpu.memory_space<vmem>>, vector<4x128xbf16>
    %2 = tpu.concatenate %0, %1 in 1 : vector<4x512xbf16>, vector<4x128xbf16> -> vector<4x640xbf16>
    %c0_3 = arith.constant 0 : index
    %c0_4 = arith.constant 0 : index
    %c0_5 = arith.constant 0 : index
    %3 = vector.load %arg3[%c0_3, %c0_4, %c0_5] : memref<9x8x4xbf16, #tpu.memory_space<vmem>>, vector<9x8x4xbf16>
    %cst = arith.constant 0.000000e+00 : f32
    %4 = vector.broadcast %cst : f32 to vector<8x512xf32>
    %5 = vector.extract_strided_slice %3 {offsets = [0, 0, 0], sizes = [1, 8, 4], strides = [1, 1, 1]} : vector<9x8x4xbf16> to vector<1x8x4xbf16>
    %6 = vector.shape_cast %5 : vector<1x8x4xbf16> to vector<8x4xbf16>
    %7 = vector.extract_strided_slice %2 {offsets = [0, 0], sizes = [4, 512], strides = [1, 1]} : vector<4x640xbf16> to vector<4x512xbf16>
    %cst_6 = arith.constant dense<0.000000e+00> : vector<8x512xf32>
    %8 = tpu.matmul %6, %7, %cst_6 {dimension_numbers = #tpu.dot_dimension_numbers<[1], [0], [0], [1], [0, 0, 1, 1], [], []>} : vector<8x4xbf16>, vector<4x512xbf16>, vector<8x512xf32> -> vector<8x512xf32>
    %9 = arith.addf %4, %8 : vector<8x512xf32>
    %10 = vector.extract_strided_slice %3 {offsets = [1, 0, 0], sizes = [1, 8, 4], strides = [1, 1, 1]} : vector<9x8x4xbf16> to vector<1x8x4xbf16>
    %11 = vector.shape_cast %10 : vector<1x8x4xbf16> to vector<8x4xbf16>
    %12 = vector.extract_strided_slice %2 {offsets = [0, 1], sizes = [4, 512], strides = [1, 1]} : vector<4x640xbf16> to vector<4x512xbf16>
    %cst_7 = arith.constant dense<0.000000e+00> : vector<8x512xf32>
    %13 = tpu.matmul %11, %12, %cst_7 {dimension_numbers = #tpu.dot_dimension_numbers<[1], [0], [0], [1], [0, 0, 1, 1], [], []>} : vector<8x4xbf16>, vector<4x512xbf16>, vector<8x512xf32> -> vector<8x512xf32>
    %14 = arith.addf %9, %13 : vector<8x512xf32>
    %15 = vector.extract_strided_slice %3 {offsets = [2, 0, 0], sizes = [1, 8, 4], strides = [1, 1, 1]} : vector<9x8x4xbf16> to vector<1x8x4xbf16>
    %16 = vector.shape_cast %15 : vector<1x8x4xbf16> to vector<8x4xbf16>
    %17 = vector.extract_strided_slice %2 {offsets = [0, 2], sizes = [4, 512], strides = [1, 1]} : vector<4x640xbf16> to vector<4x512xbf16>
    %cst_8 = arith.constant dense<0.000000e+00> : vector<8x512xf32>
    %18 = tpu.matmul %16, %17, %cst_8 {dimension_numbers = #tpu.dot_dimension_numbers<[1], [0], [0], [1], [0, 0, 1, 1], [], []>} : vector<8x4xbf16>, vector<4x512xbf16>, vector<8x512xf32> -> vector<8x512xf32>
    %19 = arith.addf %14, %18 : vector<8x512xf32>
    %20 = vector.extract_strided_slice %3 {offsets = [3, 0, 0], sizes = [1, 8, 4], strides = [1, 1, 1]} : vector<9x8x4xbf16> to vector<1x8x4xbf16>
    %21 = vector.shape_cast %20 : vector<1x8x4xbf16> to vector<8x4xbf16>
    %22 = vector.extract_strided_slice %2 {offsets = [0, 18], sizes = [4, 512], strides = [1, 1]} : vector<4x640xbf16> to vector<4x512xbf16>
    %cst_9 = arith.constant dense<0.000000e+00> : vector<8x512xf32>
    %23 = tpu.matmul %21, %22, %cst_9 {dimension_numbers = #tpu.dot_dimension_numbers<[1], [0], [0], [1], [0, 0, 1, 1], [], []>} : vector<8x4xbf16>, vector<4x512xbf16>, vector<8x512xf32> -> vector<8x512xf32>
    %24 = arith.addf %19, %23 : vector<8x512xf32>
    %25 = vector.extract_strided_slice %3 {offsets = [4, 0, 0], sizes = [1, 8, 4], strides = [1, 1, 1]} : vector<9x8x4xbf16> to vector<1x8x4xbf16>
    %26 = vector.shape_cast %25 : vector<1x8x4xbf16> to vector<8x4xbf16>
    %27 = vector.extract_strided_slice %2 {offsets = [0, 19], sizes = [4, 512], strides = [1, 1]} : vector<4x640xbf16> to vector<4x512xbf16>
    %cst_10 = arith.constant dense<0.000000e+00> : vector<8x512xf32>
    %28 = tpu.matmul %26, %27, %cst_10 {dimension_numbers = #tpu.dot_dimension_numbers<[1], [0], [0], [1], [0, 0, 1, 1], [], []>} : vector<8x4xbf16>, vector<4x512xbf16>, vector<8x512xf32> -> vector<8x512xf32>
    %29 = arith.addf %24, %28 : vector<8x512xf32>
    %30 = vector.extract_strided_slice %3 {offsets = [5, 0, 0], sizes = [1, 8, 4], strides = [1, 1, 1]} : vector<9x8x4xbf16> to vector<1x8x4xbf16>
    %31 = vector.shape_cast %30 : vector<1x8x4xbf16> to vector<8x4xbf16>
    %32 = vector.extract_strided_slice %2 {offsets = [0, 20], sizes = [4, 512], strides = [1, 1]} : vector<4x640xbf16> to vector<4x512xbf16>
    %cst_11 = arith.constant dense<0.000000e+00> : vector<8x512xf32>
    %33 = tpu.matmul %31, %32, %cst_11 {dimension_numbers = #tpu.dot_dimension_numbers<[1], [0], [0], [1], [0, 0, 1, 1], [], []>} : vector<8x4xbf16>, vector<4x512xbf16>, vector<8x512xf32> -> vector<8x512xf32>
    %34 = arith.addf %29, %33 : vector<8x512xf32>
    %35 = vector.extract_strided_slice %3 {offsets = [6, 0, 0], sizes = [1, 8, 4], strides = [1, 1, 1]} : vector<9x8x4xbf16> to vector<1x8x4xbf16>
    %36 = vector.shape_cast %35 : vector<1x8x4xbf16> to vector<8x4xbf16>
    %37 = vector.extract_strided_slice %2 {offsets = [0, 36], sizes = [4, 512], strides = [1, 1]} : vector<4x640xbf16> to vector<4x512xbf16>
    %cst_12 = arith.constant dense<0.000000e+00> : vector<8x512xf32>
    %38 = tpu.matmul %36, %37, %cst_12 {dimension_numbers = #tpu.dot_dimension_numbers<[1], [0], [0], [1], [0, 0, 1, 1], [], []>} : vector<8x4xbf16>, vector<4x512xbf16>, vector<8x512xf32> -> vector<8x512xf32>
    %39 = arith.addf %34, %38 : vector<8x512xf32>
    %40 = vector.extract_strided_slice %3 {offsets = [7, 0, 0], sizes = [1, 8, 4], strides = [1, 1, 1]} : vector<9x8x4xbf16> to vector<1x8x4xbf16>
    %41 = vector.shape_cast %40 : vector<1x8x4xbf16> to vector<8x4xbf16>
    %42 = vector.extract_strided_slice %2 {offsets = [0, 37], sizes = [4, 512], strides = [1, 1]} : vector<4x640xbf16> to vector<4x512xbf16>
    %cst_13 = arith.constant dense<0.000000e+00> : vector<8x512xf32>
    %43 = tpu.matmul %41, %42, %cst_13 {dimension_numbers = #tpu.dot_dimension_numbers<[1], [0], [0], [1], [0, 0, 1, 1], [], []>} : vector<8x4xbf16>, vector<4x512xbf16>, vector<8x512xf32> -> vector<8x512xf32>
    %44 = arith.addf %39, %43 : vector<8x512xf32>
    %45 = vector.extract_strided_slice %3 {offsets = [8, 0, 0], sizes = [1, 8, 4], strides = [1, 1, 1]} : vector<9x8x4xbf16> to vector<1x8x4xbf16>
    %46 = vector.shape_cast %45 : vector<1x8x4xbf16> to vector<8x4xbf16>
    %47 = vector.extract_strided_slice %2 {offsets = [0, 38], sizes = [4, 512], strides = [1, 1]} : vector<4x640xbf16> to vector<4x512xbf16>
    %cst_14 = arith.constant dense<0.000000e+00> : vector<8x512xf32>
    %48 = tpu.matmul %46, %47, %cst_14 {dimension_numbers = #tpu.dot_dimension_numbers<[1], [0], [0], [1], [0, 0, 1, 1], [], []>} : vector<8x4xbf16>, vector<4x512xbf16>, vector<8x512xf32> -> vector<8x512xf32>
    %49 = arith.addf %44, %48 : vector<8x512xf32>
    %c0_15 = arith.constant 0 : index
    %c0_16 = arith.constant 0 : index
    %50 = vector.load %arg5[%c0_15, %c0_16] : memref<8x512xf32, #tpu.memory_space<vmem>>, vector<8x512xf32>
    tpu.vector_store %arg5[%c0_15, %c0_16], %49 {strides = array<i32>} : memref<8x512xf32, #tpu.memory_space<vmem>>, vector<8x512xf32>,
    %c0_17 = arith.constant 0 : index
    %c0_18 = arith.constant 0 : index
    %51 = vector.load %arg4[%c0_17, %c0_18] : memref<1x512xf32, #tpu.memory_space<vmem>>, vector<1x512xf32>
    %52 = vector.broadcast %51 : vector<1x512xf32> to vector<8x512xf32>
    %53 = arith.mulf %49, %52 : vector<8x512xf32>
    %cst_19 = arith.constant dense<0.000000e+00> : vector<8xf32>
    %54 = vector.multi_reduction <add>, %53, %cst_19 [1] : vector<8x512xf32> to vector<8xf32>
    %55 = vector.shape_cast %54 : vector<8xf32> to vector<8x1xf32>
    %56 = arith.mulf %53, %49 : vector<8x512xf32>
    %cst_20 = arith.constant dense<0.000000e+00> : vector<8xf32>
    %57 = vector.multi_reduction <add>, %56, %cst_20 [1] : vector<8x512xf32> to vector<8xf32>
    %58 = vector.shape_cast %57 : vector<8xf32> to vector<8x1xf32>
    %59 = tpu.concatenate %55, %58 in 1 : vector<8x1xf32>, vector<8x1xf32> -> vector<8x2xf32>
    %60 = vector.shape_cast %59 : vector<8x2xf32> to vector<1x8x2xf32>
    %c0_21 = arith.constant 0 : index
    %c0_22 = arith.constant 0 : index
    %c0_23 = arith.constant 0 : index
    %61 = vector.load %arg6[%c0_21, %c0_22, %c0_23] : memref<1x8x2xf32, #tpu.memory_space<vmem>>, vector<1x8x2xf32>
    tpu.vector_store %arg6[%c0_21, %c0_22, %c0_23], %60 {strides = array<i32>} : memref<1x8x2xf32, #tpu.memory_space<vmem>>, vector<1x8x2xf32>,
    return
  }
  func.func @transform_0(%arg0: i32) -> (i32, i32) {
    %c0_i32 = arith.constant 0 : i32
    %c0_i32_0 = arith.constant 0 : i32
    return %c0_i32, %arg0 : i32, i32
  }
  func.func @transform_1(%arg0: i32) -> (i32, i32) {
    %c1_i32 = arith.constant 1 : i32
    %0 = arith.addi %arg0, %c1_i32 : i32
    %c4_i32 = arith.constant 4 : i32
    %1 = arith.muli %0, %c4_i32 : i32
    %c0_i32 = arith.constant 0 : i32
    %c0_i32_0 = arith.constant 0 : i32
    return %c0_i32, %1 : i32, i32
  }
  func.func @transform_2(%arg0: i32) -> (i32, i32, i32) {
    %c0_i32 = arith.constant 0 : i32
    %c0_i32_0 = arith.constant 0 : i32
    %c0_i32_1 = arith.constant 0 : i32
    %c0_i32_2 = arith.constant 0 : i32
    return %c0_i32, %c0_i32_0, %c0_i32_1 : i32, i32, i32
  }
  func.func @transform_3(%arg0: i32) -> (i32, i32) {
    %c0_i32 = arith.constant 0 : i32
    %c0_i32_0 = arith.constant 0 : i32
    return %c0_i32, %arg0 : i32, i32
  }
  func.func @transform_4(%arg0: i32) -> (i32, i32) {
    %c0_i32 = arith.constant 0 : i32
    %c0_i32_0 = arith.constant 0 : i32
    return %c0_i32, %arg0 : i32, i32
  }
  func.func @transform_5(%arg0: i32) -> (i32, i32, i32) {
    %c0_i32 = arith.constant 0 : i32
    %c0_i32_0 = arith.constant 0 : i32
    %c0_i32_1 = arith.constant 0 : i32
    return %arg0, %c0_i32, %c0_i32_0 : i32, i32, i32
  }
}

module attributes {stable_mosaic.version = 11 : i64} {
  func.func @_bn_apply_kernel(%arg0: i32, %arg1: memref<8x512xf32, #tpu.memory_space<vmem>>, %arg2: memref<8x1xf32, #tpu.memory_space<vmem>>, %arg3: memref<8x1xf32, #tpu.memory_space<vmem>>, %arg4: memref<8x512xf32, #tpu.memory_space<vmem>>) attributes {dimension_semantics = [#tpu.dimension_semantics<parallel>], iteration_bounds = array<i64: 2>, scalar_prefetch = 0 : i64, scratch_operands = 0 : i64, tpu.core_type = #tpu.core_type<tc>, window_params = [{transform_indices = @transform_0, window_bounds = array<i64: 8, 512>}, {pipeline_mode = #tpu.pipeline_mode<synchronous>, transform_indices = @transform_1, window_bounds = array<i64: 8, 1>}, {pipeline_mode = #tpu.pipeline_mode<synchronous>, transform_indices = @transform_2, window_bounds = array<i64: 8, 1>}, {transform_indices = @transform_3, window_bounds = array<i64: 8, 512>}]} {
    %c0 = arith.constant 0 : index
    %c0_0 = arith.constant 0 : index
    %0 = vector.load %arg1[%c0, %c0_0] : memref<8x512xf32, #tpu.memory_space<vmem>>, vector<8x512xf32>
    %c0_1 = arith.constant 0 : index
    %c0_2 = arith.constant 0 : index
    %1 = vector.load %arg2[%c0_1, %c0_2] : memref<8x1xf32, #tpu.memory_space<vmem>>, vector<8x1xf32>
    %2 = vector.broadcast %1 : vector<8x1xf32> to vector<8x512xf32>
    %3 = arith.mulf %0, %2 : vector<8x512xf32>
    %c0_3 = arith.constant 0 : index
    %c0_4 = arith.constant 0 : index
    %4 = vector.load %arg3[%c0_3, %c0_4] : memref<8x1xf32, #tpu.memory_space<vmem>>, vector<8x1xf32>
    %5 = vector.broadcast %4 : vector<8x1xf32> to vector<8x512xf32>
    %6 = arith.addf %3, %5 : vector<8x512xf32>
    %c0_5 = arith.constant 0 : index
    %c0_6 = arith.constant 0 : index
    %7 = vector.load %arg4[%c0_5, %c0_6] : memref<8x512xf32, #tpu.memory_space<vmem>>, vector<8x512xf32>
    tpu.vector_store %arg4[%c0_5, %c0_6], %6 {strides = array<i32>} : memref<8x512xf32, #tpu.memory_space<vmem>>, vector<8x512xf32>,
    return
  }
  func.func @transform_0(%arg0: i32) -> (i32, i32) {
    %c0_i32 = arith.constant 0 : i32
    %c0_i32_0 = arith.constant 0 : i32
    return %c0_i32, %arg0 : i32, i32
  }
  func.func @transform_1(%arg0: i32) -> (i32, i32) {
    %c0_i32 = arith.constant 0 : i32
    %c0_i32_0 = arith.constant 0 : i32
    %c0_i32_1 = arith.constant 0 : i32
    return %c0_i32, %c0_i32_0 : i32, i32
  }
  func.func @transform_2(%arg0: i32) -> (i32, i32) {
    %c0_i32 = arith.constant 0 : i32
    %c0_i32_0 = arith.constant 0 : i32
    %c0_i32_1 = arith.constant 0 : i32
    return %c0_i32, %c0_i32_0 : i32, i32
  }
  func.func @transform_3(%arg0: i32) -> (i32, i32) {
    %c0_i32 = arith.constant 0 : i32
    %c0_i32_0 = arith.constant 0 : i32
    return %c0_i32, %arg0 : i32, i32
  }
}

</mosaic_0001>

<llo_original>
// kernel: cb_forward.3
$region0: #{cb_forward.3}
  #allocation0 [shape = 'u32[]', space=smem, size = 0x4, offset = 0x4, fixed_abs, tag = 'smem constant byte address 0x4 - core index']
  #allocation1 [shape = 'u32[144,128]{1,0:T(1,128)}', space=vmem, size = 0x12000, scoped, tag = 'internal scratch']
  %s0 = inlined_call_operand.vmem [shape: f32[8,1024], index: 0, kind: input, shape index: {}, may-alias: {0,3}]
  %s1 = inlined_call_operand.vmem [shape: f32[8,1], index: 1, kind: input, shape index: {}]
  %s2 = inlined_call_operand.vmem [shape: f32[8,1], index: 2, kind: input, shape index: {}]
  %s3 = inlined_call_operand.vmem [shape: f32[8,1024], index: 3, kind: output, shape index: {}, may-alias: {0,3}]
  %s4 = sld [smem:[#allocation0]]
  $region45: #{cb_forward.3} parent=0
    _
  %s6 = ssub.s32 1, %s4
  %s7 = scalar_select 0, %s6, %s4
  loop: start=0, step=1, limit=4
  $region2: #{cb_forward.3} parent=0 // loop_pre_header
    _
  $region3: #{cb_forward.3} parent=0 // loop_header
    %s9 = sphi 0, %s13
    %p10 = scmp.ge.s32.totalorder %s9, 4
    %s19 = sphi 0, %s21
    %s22 = sphi 0, %s19
    %s23 = sphi 0, %s22
    %s39 = sphi 0, %s23
    %s43 = sphi 0, %s43
    %s45 = sphi 0, %s43
    %s46 = sphi 0, %s45
    %s60 = sphi 0, %s46
    %s64 = sphi 0, %s64
    %s66 = sphi 0, %s64
    %s67 = sphi 0, %s66
    %s81 = sphi 0, %s67
    %s87 = sphi 0, %s89
    %s90 = sphi 0, %s87
    %s91 = sphi 0, %s90
    %s107 = sphi 0, %s91
  $region4: #{cb_forward.3} parent=0 // loop_header_branch
    %12 = sbr.rel (%p10) target = $region8
  $region5: #{cb_forward.3} parent=0 // loop_body
    %s14 = ssub.s32 %s9, 1
    %s15 = ssub.s32 %s9, 2
    %s16 = sadd.s32 %s9, 1
    %s17 = ssub.s32 %s9, %s16
    %p18 = scmp.eq.s32.totalorder %s17, 0
    %s20 = sadd.s32 %s19, 1
    %s21 = scalar_select %p18, %s19, %s20
    %p24 = pneg %p18
    %p25 = scmp.eq.s32.totalorder %s9, 1
    %p26 = por %p24, %p25
    %p27 = scmp.ne.s32.totalorder %s19, %s22
    %p28 = scmp.eq.s32.totalorder %s9, 0
    %p29 = por %p27, %p28
    %p30 = scmp.ne.s32.totalorder %s19, %s22
    %p31 = scmp.eq.s32.totalorder %s14, 1
    %p32 = por %p30, %p31
    %p33 = scmp.ne.s32.totalorder %s22, %s23
    %p34 = scmp.eq.s32.totalorder %s14, 0
    %p35 = por %p33, %p34
    %p36 = scmp.ne.s32.totalorder %s22, %s23
    %p37 = scmp.eq.s32.totalorder %s15, 1
    %p38 = por %p36, %p37
    %p40 = scmp.ne.s32.totalorder %s23, %s39
    %p41 = scmp.eq.s32.totalorder %s15, 0
    %p42 = por %p40, %p41
    %s44 = sadd.s32 %s43, 1
    %p47 = scmp.eq.s32.totalorder %s9, 1
    %p48 = scmp.ne.s32.totalorder %s43, %s45
    %p49 = scmp.eq.s32.totalorder %s9, 0
    %p50 = por %p48, %p49
    %p51 = scmp.ne.s32.totalorder %s43, %s45
    %p52 = scmp.eq.s32.totalorder %s14, 1
    %p53 = por %p51, %p52
    %p54 = scmp.ne.s32.totalorder %s45, %s46
    %p55 = scmp.eq.s32.totalorder %s14, 0
    %p56 = por %p54, %p55
    %p57 = scmp.ne.s32.totalorder %s45, %s46
    %p58 = scmp.eq.s32.totalorder %s15, 1
    %p59 = por %p57, %p58
    %p61 = scmp.ne.s32.totalorder %s46, %s60
    %p62 = scmp.eq.s32.totalorder %s15, 0
    %p63 = por %p61, %p62
    %s65 = sadd.s32 %s64, 1
    %p68 = scmp.eq.s32.totalorder %s9, 1
    %p69 = scmp.ne.s32.totalorder %s64, %s66
    %p70 = scmp.eq.s32.totalorder %s9, 0
    %p71 = por %p69, %p70
    %p72 = scmp.ne.s32.totalorder %s64, %s66
    %p73 = scmp.eq.s32.totalorder %s14, 1
    %p74 = por %p72, %p73
    %p75 = scmp.ne.s32.totalorder %s66, %s67
    %p76 = scmp.eq.s32.totalorder %s14, 0
    %p77 = por %p75, %p76
    %p78 = scmp.ne.s32.totalorder %s66, %s67
    %p79 = scmp.eq.s32.totalorder %s15, 1
    %p80 = por %p78, %p79
    %p82 = scmp.ne.s32.totalorder %s67, %s81
    %p83 = scmp.eq.s32.totalorder %s15, 0
    %p84 = por %p82, %p83
    %s85 = ssub.s32 %s9, %s16
    %p86 = scmp.eq.s32.totalorder %s85, 0
    %s88 = sadd.s32 %s87, 1
    %s89 = scalar_select %p86, %s87, %s88
    %p92 = pneg %p86
    %p93 = scmp.eq.s32.totalorder %s9, 1
    %p94 = por %p92, %p93
    %p95 = scmp.ne.s32.totalorder %s87, %s90
    %p96 = scmp.eq.s32.totalorder %s9, 0
    %p97 = por %p95, %p96
    %p98 = scmp.ne.s32.totalorder %s87, %s90
    %p99 = scmp.eq.s32.totalorder %s14, 1
    %p100 = por %p98, %p99
    %p101 = scmp.ne.s32.totalorder %s90, %s91
    %p102 = scmp.eq.s32.totalorder %s14, 0
    %p103 = por %p101, %p102
    %p104 = scmp.ne.s32.totalorder %s90, %s91
    %p105 = scmp.eq.s32.totalorder %s15, 1
    %p106 = por %p104, %p105
    %p108 = scmp.ne.s32.totalorder %s91, %s107
    %p109 = scmp.eq.s32.totalorder %s15, 0
    %p110 = por %p108, %p109
    %p111 = scmp.le.s32.totalorder 1, %s9
    %p112 = scmp.lt.s32.totalorder %s9, 3
    %p113 = pnand %p111, %p112
    %p114 = pneg %p113
    // Predicated region
    $region9: #{cb_forward.3} parent=5 // pred_check
      _
    $region10: #{cb_forward.3} parent=5 // pred_check_branch
      %116 = sbr.rel (%p113) target = $region12
    $region11: #{cb_forward.3} parent=5 // pred_region
      %s117 = ssub.s32 %s9, 1
      // Predicated region
      $region13: #{cb_forward.3} parent=11 // pred_check
        %p118 = pneg %p56
      $region14: #{cb_forward.3} parent=11 // pred_check_branch
        %120 = sbr.rel (%p118) target = $region16
      $region15: #{cb_forward.3} parent=11 // pred_region
        _
      $region16: #{cb_forward.3} parent=11 // pred_fallthru
        _
      // Predicated region
      $region17: #{cb_forward.3} parent=11 // pred_check
        %p121 = pneg %p77
      $region18: #{cb_forward.3} parent=11 // pred_check_branch
        %123 = sbr.rel (%p121) target = $region20
      $region19: #{cb_forward.3} parent=11 // pred_region
        _
      $region20: #{cb_forward.3} parent=11 // pred_fallthru
        _
    $region12: #{cb_forward.3} parent=5 // pred_fallthru
      _
    %p124 = scmp.lt.s32.totalorder %s9, 2
    // Predicated region
    $region21: #{cb_forward.3} parent=5 // pred_check
      %p125 = pneg %p124
    $region22: #{cb_forward.3} parent=5 // pred_check_branch
      %127 = sbr.rel (%p125) target = $region24
    $region23: #{cb_forward.3} parent=5 // pred_region
      // Predicated region
      $region25: #{cb_forward.3} parent=23 // pred_check
        %p128 = pneg %p29
      $region26: #{cb_forward.3} parent=23 // pred_check_branch
        %130 = sbr.rel (%p128) target = $region28
      $region27: #{cb_forward.3} parent=23 // pred_region
        %s131 = smul.u32 4, %s9
        %p132 = scmp.lt.s32.totalorder %s131, 7
        %s133 = scalar_select %p132, %s131, 7
        %s134 = smul.addr %s133, 8
        %s135 = scalar_lea.vmem %s0, %s134
        %s136 = smul.u32 4, %s9
      $region28: #{cb_forward.3} parent=23 // pred_fallthru
        _
    $region24: #{cb_forward.3} parent=5 // pred_fallthru
      _
    %p137 = scmp.le.s32.totalorder 1, %s9
    %p138 = scmp.lt.s32.totalorder %s9, 3
    %p139 = pnand %p137, %p138
    %p140 = pneg %p139
    // Predicated region
    $region29: #{cb_forward.3} parent=5 // pred_check
      _
    $region30: #{cb_forward.3} parent=5 // pred_check_branch
      %142 = sbr.rel (%p139) target = $region32
    $region31: #{cb_forward.3} parent=5 // pred_region
      %s143 = ssub.s32 %s9, 1
      %s144 = smul.u32 4, %s14
      %p145 = scmp.lt.s32.totalorder %s144, 7
      %s146 = scalar_select %p145, %s144, 7
      %s147 = smul.addr %s146, 8
      %s148 = scalar_lea.vmem %s0, %s147
      %p149 = pneg %p35
      %p150 = pneg %p32
      %p151 = pneg %p56
      %p152 = pneg %p53
      %p153 = pneg %p77
      %p154 = pneg %p74
      %p155 = pneg %p103
      %p156 = pneg %p100
      %s157 = smul.u32 4, %s14
      %p158 = scmp.lt.s32.totalorder %s157, 7
      %s159 = scalar_select %p158, %s157, 7
      %s160 = smul.addr %s159, 8
      %s161 = scalar_lea.vmem %s3, %s160
      %s162 = smul.u32 4, %s14
      %p163 = scmp.lt.s32.totalorder %s162, 7
      %s164 = scalar_select %p163, %s162, 7
      %s165 = smul.addr %s164, 8
      %s166 = scalar_lea.vmem %s0, %s165
      %s167 = smul.u32 4, %s14
      %s168 = smul.u32 4, %s14
      %p169 = scmp.lt.s32.totalorder %s168, 7
      %s170 = scalar_select %p169, %s168, 7
      %s171 = smul.addr %s170, 8
      %s172 = scalar_lea.vmem %s3, %s171
      %s173 = smul.u32 4, %s14
      %v174 = vld [vmem:[%s166] sm:$0xff]
      %v175 = vld [vmem:[%s166 + $0x8] sm:$0xff]
      %v176 = vld [vmem:[%s166 + $0x10] sm:$0xff]
      %v177 = vld [vmem:[%s166 + $0x18] sm:$0xff]
      %v178 = vld [vmem:[%s1] sm:$0xff]
      %180 = vset.pattern.permute.xlu0 0
      %181 = vperm.xlu0 %180, %v178
      %v182 = vpop.permute.xlu0 %181
      %v184 = vmul.f32 %v174, %v182
      %v185 = vmul.f32 %v175, %v182
      %v186 = vmul.f32 %v176, %v182
      %v187 = vmul.f32 %v177, %v182
      %v188 = vld [vmem:[%s2] sm:$0xff]
      %190 = vset.pattern.permute.xlu0 0
      %191 = vperm.xlu0 %190, %v188
      %v192 = vpop.permute.xlu0 %191
      %v194 = vadd.f32 %v184, %v192
      %v195 = vadd.f32 %v185, %v192
      %v196 = vadd.f32 %v186, %v192
      %v197 = vadd.f32 %v187, %v192
      %198 = vst [vmem:[%s172] sm:$0xff] %v194
      %199 = vst [vmem:[%s172 + $0x8] sm:$0xff] %v195
      %200 = vst [vmem:[%s172 + $0x10] sm:$0xff] %v196
      %201 = vst [vmem:[%s172 + $0x18] sm:$0xff] %v197
      %s202 = smul.u32 4, %s14
      %p203 = scmp.lt.s32.totalorder %s202, 7
      %s204 = scalar_select %p203, %s202, 7
      %s205 = smul.addr %s204, 8
      %s206 = scalar_lea.vmem %s3, %s205
      // Predicated region
      $region33: #{cb_forward.3} parent=31 // pred_check
        %p207 = pneg %p100
      $region34: #{cb_forward.3} parent=31 // pred_check_branch
        %209 = sbr.rel (%p207) target = $region36
      $region35: #{cb_forward.3} parent=31 // pred_region
        %s210 = smul.u32 4, %s14
      $region36: #{cb_forward.3} parent=31 // pred_fallthru
        _
    $region32: #{cb_forward.3} parent=5 // pred_fallthru
      _
    %p211 = scmp.le.s32.totalorder 2, %s9
    // Predicated region
    $region37: #{cb_forward.3} parent=5 // pred_check
      %p212 = pneg %p211
    $region38: #{cb_forward.3} parent=5 // pred_check_branch
      %214 = sbr.rel (%p212) target = $region40
    $region39: #{cb_forward.3} parent=5 // pred_region
      %s215 = ssub.s32 %s9, 2
      // Predicated region
      $region41: #{cb_forward.3} parent=39 // pred_check
        %p216 = pneg %p106
      $region42: #{cb_forward.3} parent=39 // pred_check_branch
        %218 = sbr.rel (%p216) target = $region44
      $region43: #{cb_forward.3} parent=39 // pred_region
        %s219 = smul.u32 4, %s15
        %p220 = scmp.lt.s32.totalorder %s219, 7
        %s221 = scalar_select %p220, %s219, 7
        %s222 = smul.addr %s221, 8
        %s223 = scalar_lea.vmem %s3, %s222
      $region44: #{cb_forward.3} parent=39 // pred_fallthru
        _
    $region40: #{cb_forward.3} parent=5 // pred_fallthru
      _
  $region6: #{cb_forward.3} parent=0 // loop_footer
    %s13 = sadd.s32 1, %s9
  $region7: #{cb_forward.3} parent=0 // loop_footer_branch
    %8 = sbr.rel target = $region3
  $region8: #{cb_forward.3} parent=0 // loop_exit
    _

// kernel: cb_forward.2
$region0: #{cb_forward.2}
  #allocation0 [shape = 'u32[]', space=smem, size = 0x4, offset = 0x4, fixed_abs, tag = 'smem constant byte address 0x4 - core index']
  #allocation1 [shape = 'u32[144,128]{1,0:T(1,128)}', space=vmem, size = 0x12000, scoped, tag = 'internal scratch']
  %s0 = inlined_call_operand.vmem [shape: bf16[4,1152], index: 0, kind: input, shape index: {}, may-alias: {0,1}]
  %s1 = inlined_call_operand.vmem [shape: bf16[4,1152], index: 1, kind: input, shape index: {}, may-alias: {0,1}]
  %s2 = inlined_call_operand.vmem [shape: bf16[9,8,4], index: 2, kind: input, shape index: {}]
  %s3 = inlined_call_operand.vmem [shape: f32[1,1024], index: 3, kind: input, shape index: {}]
  %s4 = inlined_call_operand.vmem [shape: f32[8,1024], index: 4, kind: output, shape index: {0}]
  %s5 = inlined_call_operand.vmem [shape: f32[2,8,2], index: 5, kind: output, shape index: {1}]
  %6 = xla_tuple %s4, %s5
  %s7 = sld [smem:[#allocation0]]
  $region57: #{cb_forward.2} parent=0
    _
  %s9 = ssub.s32 1, %s7
  %s10 = scalar_select 0, %s9, %s7
  loop: start=0, step=1, limit=4
  $region2: #{cb_forward.2} parent=0 // loop_pre_header
    _
  $region3: #{cb_forward.2} parent=0 // loop_header
    %s12 = sphi 0, %s16
    %p13 = scmp.ge.s32.totalorder %s12, 4
    %s22 = sphi 0, %s24
    %s25 = sphi 0, %s22
    %s26 = sphi 0, %s25
    %s42 = sphi 0, %s26
    %s52 = sphi 0, %s54
    %s55 = sphi 0, %s52
    %s56 = sphi 0, %s55
    %s72 = sphi 0, %s56
    %s76 = sphi 0, %s76
    %s78 = sphi 0, %s76
    %s79 = sphi 0, %s78
    %s93 = sphi 0, %s79
    %s99 = sphi 0, %s101
    %s102 = sphi 0, %s99
    %s103 = sphi 0, %s102
    %s119 = sphi 0, %s103
    %s125 = sphi 0, %s127
    %s128 = sphi 0, %s125
    %s129 = sphi 0, %s128
    %s145 = sphi 0, %s129
    %s151 = sphi 0, %s153
    %s154 = sphi 0, %s151
    %s155 = sphi 0, %s154
    %s171 = sphi 0, %s155
  $region4: #{cb_forward.2} parent=0 // loop_header_branch
    %15 = sbr.rel (%p13) target = $region8
  $region5: #{cb_forward.2} parent=0 // loop_body
    %s17 = ssub.s32 %s12, 1
    %s18 = ssub.s32 %s12, 2
    %s19 = sadd.s32 %s12, 1
    %s20 = ssub.s32 %s12, %s19
    %p21 = scmp.eq.s32.totalorder %s20, 0
    %s23 = sadd.s32 %s22, 1
    %s24 = scalar_select %p21, %s22, %s23
    %p27 = pneg %p21
    %p28 = scmp.eq.s32.totalorder %s12, 1
    %p29 = por %p27, %p28
    %p30 = scmp.ne.s32.totalorder %s22, %s25
    %p31 = scmp.eq.s32.totalorder %s12, 0
    %p32 = por %p30, %p31
    %p33 = scmp.ne.s32.totalorder %s22, %s25
    %p34 = scmp.eq.s32.totalorder %s17, 1
    %p35 = por %p33, %p34
    %p36 = scmp.ne.s32.totalorder %s25, %s26
    %p37 = scmp.eq.s32.totalorder %s17, 0
    %p38 = por %p36, %p37
    %p39 = scmp.ne.s32.totalorder %s25, %s26
    %p40 = scmp.eq.s32.totalorder %s18, 1
    %p41 = por %p39, %p40
    %p43 = scmp.ne.s32.totalorder %s26, %s42
    %p44 = scmp.eq.s32.totalorder %s18, 0
    %p45 = por %p43, %p44
    %s46 = sadd.s32 %s12, 1
    %s47 = smul.u32 %s46, 4
    %s48 = sadd.s32 %s19, 1
    %s49 = smul.u32 %s48, 4
    %s50 = ssub.s32 %s47, %s49
    %p51 = scmp.eq.s32.totalorder %s50, 0
    %s53 = sadd.s32 %s52, 1
    %s54 = scalar_select %p51, %s52, %s53
    %p57 = pneg %p51
    %p58 = scmp.eq.s32.totalorder %s12, 1
    %p59 = por %p57, %p58
    %p60 = scmp.ne.s32.totalorder %s52, %s55
    %p61 = scmp.eq.s32.totalorder %s12, 0
    %p62 = por %p60, %p61
    %p63 = scmp.ne.s32.totalorder %s52, %s55
    %p64 = scmp.eq.s32.totalorder %s17, 1
    %p65 = por %p63, %p64
    %p66 = scmp.ne.s32.totalorder %s55, %s56
    %p67 = scmp.eq.s32.totalorder %s17, 0
    %p68 = por %p66, %p67
    %p69 = scmp.ne.s32.totalorder %s55, %s56
    %p70 = scmp.eq.s32.totalorder %s18, 1
    %p71 = por %p69, %p70
    %p73 = scmp.ne.s32.totalorder %s56, %s72
    %p74 = scmp.eq.s32.totalorder %s18, 0
    %p75 = por %p73, %p74
    %s77 = sadd.s32 %s76, 1
    %p80 = scmp.eq.s32.totalorder %s12, 1
    %p81 = scmp.ne.s32.totalorder %s76, %s78
    %p82 = scmp.eq.s32.totalorder %s12, 0
    %p83 = por %p81, %p82
    %p84 = scmp.ne.s32.totalorder %s76, %s78
    %p85 = scmp.eq.s32.totalorder %s17, 1
    %p86 = por %p84, %p85
    %p87 = scmp.ne.s32.totalorder %s78, %s79
    %p88 = scmp.eq.s32.totalorder %s17, 0
    %p89 = por %p87, %p88
    %p90 = scmp.ne.s32.totalorder %s78, %s79
    %p91 = scmp.eq.s32.totalorder %s18, 1
    %p92 = por %p90, %p91
    %p94 = scmp.ne.s32.totalorder %s79, %s93
    %p95 = scmp.eq.s32.totalorder %s18, 0
    %p96 = por %p94, %p95
    %s97 = ssub.s32 %s12, %s19
    %p98 = scmp.eq.s32.totalorder %s97, 0
    %s100 = sadd.s32 %s99, 1
    %s101 = scalar_select %p98, %s99, %s100
    %p104 = pneg %p98
    %p105 = scmp.eq.s32.totalorder %s12, 1
    %p106 = por %p104, %p105
    %p107 = scmp.ne.s32.totalorder %s99, %s102
    %p108 = scmp.eq.s32.totalorder %s12, 0
    %p109 = por %p107, %p108
    %p110 = scmp.ne.s32.totalorder %s99, %s102
    %p111 = scmp.eq.s32.totalorder %s17, 1
    %p112 = por %p110, %p111
    %p113 = scmp.ne.s32.totalorder %s102, %s103
    %p114 = scmp.eq.s32.totalorder %s17, 0
    %p115 = por %p113, %p114
    %p116 = scmp.ne.s32.totalorder %s102, %s103
    %p117 = scmp.eq.s32.totalorder %s18, 1
    %p118 = por %p116, %p117
    %p120 = scmp.ne.s32.totalorder %s103, %s119
    %p121 = scmp.eq.s32.totalorder %s18, 0
    %p122 = por %p120, %p121
    %s123 = ssub.s32 %s12, %s19
    %p124 = scmp.eq.s32.totalorder %s123, 0
    %s126 = sadd.s32 %s125, 1
    %s127 = scalar_select %p124, %s125, %s126
    %p130 = pneg %p124
    %p131 = scmp.eq.s32.totalorder %s12, 1
    %p132 = por %p130, %p131
    %p133 = scmp.ne.s32.totalorder %s125, %s128
    %p134 = scmp.eq.s32.totalorder %s12, 0
    %p135 = por %p133, %p134
    %p136 = scmp.ne.s32.totalorder %s125, %s128
    %p137 = scmp.eq.s32.totalorder %s17, 1
    %p138 = por %p136, %p137
    %p139 = scmp.ne.s32.totalorder %s128, %s129
    %p140 = scmp.eq.s32.totalorder %s17, 0
    %p141 = por %p139, %p140
    %p142 = scmp.ne.s32.totalorder %s128, %s129
    %p143 = scmp.eq.s32.totalorder %s18, 1
    %p144 = por %p142, %p143
    %p146 = scmp.ne.s32.totalorder %s129, %s145
    %p147 = scmp.eq.s32.totalorder %s18, 0
    %p148 = por %p146, %p147
    %s149 = ssub.s32 %s12, %s19
    %p150 = scmp.eq.s32.totalorder %s149, 0
    %s152 = sadd.s32 %s151, 1
    %s153 = scalar_select %p150, %s151, %s152
    %p156 = pneg %p150
    %p157 = scmp.eq.s32.totalorder %s12, 1
    %p158 = por %p156, %p157
    %p159 = scmp.ne.s32.totalorder %s151, %s154
    %p160 = scmp.eq.s32.totalorder %s12, 0
    %p161 = por %p159, %p160
    %p162 = scmp.ne.s32.totalorder %s151, %s154
    %p163 = scmp.eq.s32.totalorder %s17, 1
    %p164 = por %p162, %p163
    %p165 = scmp.ne.s32.totalorder %s154, %s155
    %p166 = scmp.eq.s32.totalorder %s17, 0
    %p167 = por %p165, %p166
    %p168 = scmp.ne.s32.totalorder %s154, %s155
    %p169 = scmp.eq.s32.totalorder %s18, 1
    %p170 = por %p168, %p169
    %p172 = scmp.ne.s32.totalorder %s155, %s171
    %p173 = scmp.eq.s32.totalorder %s18, 0
    %p174 = por %p172, %p173
    %p175 = scmp.le.s32.totalorder 1, %s12
    %p176 = scmp.lt.s32.totalorder %s12, 3
    %p177 = pnand %p175, %p176
    %p178 = pneg %p177
    // Predicated region
    $region9: #{cb_forward.2} parent=5 // pred_check
      _
    $region10: #{cb_forward.2} parent=5 // pred_check_branch
      %180 = sbr.rel (%p177) target = $region12
    $region11: #{cb_forward.2} parent=5 // pred_region
      %s181 = ssub.s32 %s12, 1
      // Predicated region
      $region13: #{cb_forward.2} parent=11 // pred_check
        %p182 = pneg %p89
      $region14: #{cb_forward.2} parent=11 // pred_check_branch
        %184 = sbr.rel (%p182) target = $region16
      $region15: #{cb_forward.2} parent=11 // pred_region
        _
      $region16: #{cb_forward.2} parent=11 // pred_fallthru
        _
    $region12: #{cb_forward.2} parent=5 // pred_fallthru
      _
    %p185 = scmp.lt.s32.totalorder %s12, 2
    // Predicated region
    $region17: #{cb_forward.2} parent=5 // pred_check
      %p186 = pneg %p185
    $region18: #{cb_forward.2} parent=5 // pred_check_branch
      %188 = sbr.rel (%p186) target = $region20
    $region19: #{cb_forward.2} parent=5 // pred_region
      // Predicated region
      $region21: #{cb_forward.2} parent=19 // pred_check
        %p189 = pneg %p32
      $region22: #{cb_forward.2} parent=19 // pred_check_branch
        %191 = sbr.rel (%p189) target = $region24
      $region23: #{cb_forward.2} parent=19 // pred_region
        %s192 = smul.u32 4, %s12
        %s193 = ssub.s32 9, %s192
        %p194 = scmp.lt.s32.totalorder %s193, 4
        %s195 = scalar_select %p194, %s193, 4
        %s196 = smul.u32 32, %s195
        %p197 = scmp.lt.s32.totalorder %s192, 8
        %s198 = scalar_select %p197, %s192, 8
        %s199 = smul.addr %s198, 2
        %s200 = scalar_lea.vmem %s0, %s199
        %s201 = smul.u32 4, %s12
        %s202 = ssub.s32 9, %s201
        %p203 = scmp.lt.s32.totalorder %s202, 4
        %s204 = scalar_select %p203, %s202, 4
        %s205 = smul.u32 32, %s204
      $region24: #{cb_forward.2} parent=19 // pred_fallthru
        _
      // Predicated region
      $region25: #{cb_forward.2} parent=19 // pred_check
        %p206 = pneg %p62
      $region26: #{cb_forward.2} parent=19 // pred_check_branch
        %208 = sbr.rel (%p206) target = $region28
      $region27: #{cb_forward.2} parent=19 // pred_region
        %s209 = sadd.s32 %s12, 1
        %s210 = smul.u32 %s209, 4
        %p211 = scmp.lt.s32.totalorder %s210, 8
        %s212 = scalar_select %p211, %s210, 8
        %s213 = smul.addr %s212, 2
        %s214 = scalar_lea.vmem %s1, %s213
        %s215 = sadd.s32 %s12, 1
        %s216 = smul.u32 %s215, 4
      $region28: #{cb_forward.2} parent=19 // pred_fallthru
        _
      // Predicated region
      $region29: #{cb_forward.2} parent=19 // pred_check
        %p217 = pneg %p109
      $region30: #{cb_forward.2} parent=19 // pred_check_branch
        %219 = sbr.rel (%p217) target = $region32
      $region31: #{cb_forward.2} parent=19 // pred_region
        %s220 = smul.u32 4, %s12
        %p221 = scmp.lt.s32.totalorder %s220, 7
        %s222 = scalar_select %p221, %s220, 7
        %s223 = scalar_lea.vmem %s3, %s222
        %s224 = smul.u32 4, %s12
      $region32: #{cb_forward.2} parent=19 // pred_fallthru
        _
    $region20: #{cb_forward.2} parent=5 // pred_fallthru
      _
    %p225 = scmp.le.s32.totalorder 1, %s12
    %p226 = scmp.lt.s32.totalorder %s12, 3
    %p227 = pnand %p225, %p226
    %p228 = pneg %p227
    // Predicated region
    $region33: #{cb_forward.2} parent=5 // pred_check
      _
    $region34: #{cb_forward.2} parent=5 // pred_check_branch
      %230 = sbr.rel (%p227) target = $region36
    $region35: #{cb_forward.2} parent=5 // pred_region
      %s231 = ssub.s32 %s12, 1
      %s232 = smul.u32 4, %s17
      %s233 = ssub.s32 9, %s232
      %p234 = scmp.lt.s32.totalorder %s233, 4
      %s235 = scalar_select %p234, %s233, 4
      %s236 = smul.u32 32, %s235
      %p237 = scmp.lt.s32.totalorder %s232, 8
      %s238 = scalar_select %p237, %s232, 8
      %s239 = smul.addr %s238, 2
      %s240 = scalar_lea.vmem %s0, %s239
      %p241 = pneg %p38
      %p242 = pneg %p35
      %s243 = sadd.s32 %s17, 1
      %s244 = smul.u32 %s243, 4
      %p245 = scmp.lt.s32.totalorder %s244, 8
      %s246 = scalar_select %p245, %s244, 8
      %s247 = smul.addr %s246, 2
      %s248 = scalar_lea.vmem %s1, %s247
      %p249 = pneg %p68
      %p250 = pneg %p65
      %p251 = pneg %p89
      %p252 = pneg %p86
      %s253 = smul.u32 4, %s17
      %p254 = scmp.lt.s32.totalorder %s253, 7
      %s255 = scalar_select %p254, %s253, 7
      %s256 = scalar_lea.vmem %s3, %s255
      %p257 = pneg %p115
      %p258 = pneg %p112
      %p259 = pneg %p141
      %p260 = pneg %p138
      %s261 = smul.u32 4, %s17
      %p262 = scmp.lt.s32.totalorder %s261, 7
      %s263 = scalar_select %p262, %s261, 7
      %s264 = smul.addr %s263, 8
      %s265 = scalar_lea.vmem %s4, %s264
      %p266 = pneg %p167
      %p267 = pneg %p164
      %p268 = scmp.lt.s32.totalorder %s17, 1
      %s269 = scalar_select %p268, %s17, 1
      %s270 = smul.addr %s269, 8
      %s271 = scalar_lea.vmem %s5, %s270
      %s272 = smul.u32 4, %s17
      %s273 = ssub.s32 9, %s272
      %p274 = scmp.lt.s32.totalorder %s273, 4
      %s275 = scalar_select %p274, %s273, 4
      %s276 = smul.u32 32, %s275
      %p277 = scmp.lt.s32.totalorder %s272, 8
      %s278 = scalar_select %p277, %s272, 8
      %s279 = smul.addr %s278, 2
      %s280 = scalar_lea.vmem %s0, %s279
      %s281 = smul.u32 4, %s17
      %s282 = ssub.s32 9, %s281
      %p283 = scmp.lt.s32.totalorder %s282, 4
      %s284 = scalar_select %p283, %s282, 4
      %s285 = smul.u32 32, %s284
      %s286 = sadd.s32 %s17, 1
      %s287 = smul.u32 %s286, 4
      %p288 = scmp.lt.s32.totalorder %s287, 8
      %s289 = scalar_select %p288, %s287, 8
      %s290 = smul.addr %s289, 2
      %s291 = scalar_lea.vmem %s1, %s290
      %s292 = sadd.s32 %s17, 1
      %s293 = smul.u32 %s292, 4
      %s294 = smul.u32 4, %s17
      %p295 = scmp.lt.s32.totalorder %s294, 7
      %s296 = scalar_select %p295, %s294, 7
      %s297 = scalar_lea.vmem %s3, %s296
      %s298 = smul.u32 4, %s17
      %s299 = smul.u32 4, %s17
      %p300 = scmp.lt.s32.totalorder %s299, 7
      %s301 = scalar_select %p300, %s299, 7
      %s302 = smul.addr %s301, 8
      %s303 = scalar_lea.vmem %s4, %s302
      %s304 = smul.u32 4, %s17
      %p305 = scmp.lt.s32.totalorder %s17, 1
      %s306 = scalar_select %p305, %s17, 1
      %s307 = smul.addr %s306, 8
      %s308 = scalar_lea.vmem %s5, %s307
      %v310 = vld [vmem:[%s280] sm:$0xff]
      %v311 = vld [vmem:[%s291] sm:$0x3]
      %v313 = vcombine.high %v310, %v310
      %v315 = vunpack.c.l.s4 1983009808
      %v316 = vunpack.c.0.s8 %v315
      %v317 = vlaneseq
      %v318 = vshrl.u32 %v317, 7
      %v319 = vsub.s32 %v316, %v318
      %v320 = vrot.slane %v310, %v319
      %v322 = vunpack.c.l.s4 1983009808
      %v323 = vunpack.c.0.s8 %v322
      %v324 = vlaneseq
      %v325 = vshrl.u32 %v324, 7
      %v326 = vsub.s32 %v323, %v325
      %v327 = vrot.slane %v313, %v326
      %v328 = vcombine.high %v320, %v320
      %v329 = vcombine.high %v327, %v327
      %v330 = vld [vmem:[%s2] sm:$0xf]
      %v331 = vld [vmem:[%s2 + $0x4] sm:$0xf]
      %v332 = vld [vmem:[%s2 + $0x8] sm:$0xf]
      %v333 = vld [vmem:[%s2 + $0xc] sm:$0xf]
      %v334 = vld [vmem:[%s2 + $0x10] sm:$0xf]
      %v335 = vld [vmem:[%s2 + $0x14] sm:$0xf]
      %v336 = vld [vmem:[%s2 + $0x18] sm:$0xf]
      %v337 = vld [vmem:[%s2 + $0x1c] sm:$0xf]
      %v338 = vld [vmem:[%s2 + $0x20] sm:$0xf]
      %340 = vrot.lane.b32.xlu0 %v320, 127
      %v341 = vpop.permute.xlu0 %340
      %342 = vrot.lane.b32.xlu0 %v328, 127
      %v343 = vpop.permute.xlu0 %342
      %344 = vrot.lane.b32.xlu0 %v327, 127
      %v345 = vpop.permute.xlu0 %344
      %346 = vrot.lane.b32.xlu0 %v329, 127
      %v347 = vpop.permute.xlu0 %346
      %348 = vrot.lane.b32.xlu0 %v311, 127
      %v349 = vpop.permute.xlu0 %348
      %vm350 = vcmask 1039360
      %v351 = vsel %vm350, %v341, %v343
      %v352 = vsel %vm350, %v343, %v345
      %v353 = vsel %vm350, %v345, %v347
      %v354 = vsel %vm350, %v347, %v349
      %vm355 = vcmask 31744
      %v357 = vsel %vm355, %v331, 0
      %vm359 = vcmask 1041408
      %v361 = vsel %vm359, %v351, 0
      %v364 = vsel %vm359, %v352, 0
      %v367 = vsel %vm359, %v353, 0
      %v370 = vsel %vm359, %v354, 0
      %372 = vmatprep.subr.bf16.mxu0 0
      %373 = vmatpush1.bf16.msra.mxu0 0
      %374 = vmatprep.subr.bf16.mxu0 0
      %375 = vmatpush1.bf16.msra.mxu0 0
      %376 = vmatprep.subr.bf16.mxu0 0
      %377 = vmatpush1.bf16.msra.mxu0 0
      %378 = vmatprep.subr.bf16.mxu0 0
      %379 = vmatpush1.bf16.msra.mxu0 0
      %380 = vmatprep.subr.bf16.mxu0 0
      %381 = vmatpush1.bf16.msra.mxu0 0
      %382 = vmatprep.subr.bf16.mxu0 0
      %383 = vmatpush1.bf16.msra.mxu0 0
      %384 = vmatprep.subr.bf16.mxu0 0
      %385 = vmatpush1.bf16.msra.mxu0 0
      %386 = vmatprep.subr.bf16.mxu0 %v364
      %387 = vmatpush1.bf16.msra.mxu0 %v361
      %388 = vmatprep.subr.bf16.mxu0 0
      %389 = vmatpush2.bf16.msra.mxu0 0
      %390 = vmatprep.subr.bf16.mxu0 0
      %391 = vmatpush2.bf16.msra.mxu0 0
      %392 = vmatprep.subr.bf16.mxu0 0
      %393 = vmatpush2.bf16.msra.mxu0 0
      %394 = vmatprep.subr.bf16.mxu0 0
      %395 = vmatpush2.bf16.msra.mxu0 0
      %396 = vmatprep.subr.bf16.mxu0 0
      %397 = vmatpush2.bf16.msra.mxu0 0
      %398 = vmatprep.subr.bf16.mxu0 0
      %399 = vmatpush2.bf16.msra.mxu0 0
      %400 = vmatprep.subr.bf16.mxu0 0
      %401 = vmatpush2.bf16.msra.mxu0 0
      %402 = vmatprep.subr.bf16.mxu0 0
      %403 = vmatpush2.bf16.msra.mxu0 0
      %404 = vmatprep.mubr.bf16.mxu0 0
      %405 = vmatmul.mubr.bf16.gmra.mxu0 %v357
      %v406 = vpop.f32.mrf.mxu0
      %v407 = vadd.f32 0.0, %v406
      %v408 = vpop.f32.mrf.mxu0
      %v409 = vadd.f32 0.0, %v408
      %v410 = vpop.f32.mrf.mxu0
      %v411 = vpop.f32.mrf.mxu0
      %412 = vdwg.mxu0
      %413 = vmatprep.subr.bf16.mxu0 0
      %414 = vmatpush1.bf16.msra.mxu0 0
      %415 = vmatprep.subr.bf16.mxu0 0
      %416 = vmatpush1.bf16.msra.mxu0 0
      %417 = vmatprep.subr.bf16.mxu0 0
      %418 = vmatpush1.bf16.msra.mxu0 0
      %419 = vmatprep.subr.bf16.mxu0 0
      %420 = vmatpush1.bf16.msra.mxu0 0
      %421 = vmatprep.subr.bf16.mxu0 0
      %422 = vmatpush1.bf16.msra.mxu0 0
      %423 = vmatprep.subr.bf16.mxu0 0
      %424 = vmatpush1.bf16.msra.mxu0 0
      %425 = vmatprep.subr.bf16.mxu0 0
      %426 = vmatpush1.bf16.msra.mxu0 0
      %427 = vmatprep.subr.bf16.mxu0 %v370
      %428 = vmatpush1.bf16.msra.mxu0 %v367
      %429 = vmatprep.subr.bf16.mxu0 0
      %430 = vmatpush2.bf16.msra.mxu0 0
      %431 = vmatprep.subr.bf16.mxu0 0
      %432 = vmatpush2.bf16.msra.mxu0 0
      %433 = vmatprep.subr.bf16.mxu0 0
      %434 = vmatpush2.bf16.msra.mxu0 0
      %435 = vmatprep.subr.bf16.mxu0 0
      %436 = vmatpush2.bf16.msra.mxu0 0
      %437 = vmatprep.subr.bf16.mxu0 0
      %438 = vmatpush2.bf16.msra.mxu0 0
      %439 = vmatprep.subr.bf16.mxu0 0
      %440 = vmatpush2.bf16.msra.mxu0 0
      %441 = vmatprep.subr.bf16.mxu0 0
      %442 = vmatpush2.bf16.msra.mxu0 0
      %443 = vmatprep.subr.bf16.mxu0 0
      %444 = vmatpush2.bf16.msra.mxu0 0
      %445 = vmatprep.mubr.bf16.mxu0 0
      %446 = vmatmul.mubr.bf16.gmra.mxu0 %v357
      %v447 = vpop.f32.mrf.mxu0
      %v448 = vadd.f32 0.0, %v447
      %v449 = vpop.f32.mrf.mxu0
      %v450 = vadd.f32 0.0, %v449
      %v451 = vpop.f32.mrf.mxu0
      %v452 = vpop.f32.mrf.mxu0
      %453 = vdwg.mxu0
      %v455 = vsel %vm355, %v330, 0
      %v458 = vsel %vm359, %v320, 0
      %v461 = vsel %vm359, %v328, 0
      %v464 = vsel %vm359, %v327, 0
      %v467 = vsel %vm359, %v329, 0
      %469 = vmatprep.subr.bf16.mxu0 0
      %470 = vmatpush1.bf16.msra.mxu0 0
      %471 = vmatprep.subr.bf16.mxu0 0
      %472 = vmatpush1.bf16.msra.mxu0 0
      %473 = vmatprep.subr.bf16.mxu0 0
      %474 = vmatpush1.bf16.msra.mxu0 0
      %475 = vmatprep.subr.bf16.mxu0 0
      %476 = vmatpush1.bf16.msra.mxu0 0
      %477 = vmatprep.subr.bf16.mxu0 0
      %478 = vmatpush1.bf16.msra.mxu0 0
      %479 = vmatprep.subr.bf16.mxu0 0
      %480 = vmatpush1.bf16.msra.mxu0 0
      %481 = vmatprep.subr.bf16.mxu0 0
      %482 = vmatpush1.bf16.msra.mxu0 0
      %483 = vmatprep.subr.bf16.mxu0 %v461
      %484 = vmatpush1.bf16.msra.mxu0 %v458
      %485 = vmatprep.subr.bf16.mxu0 0
      %486 = vmatpush2.bf16.msra.mxu0 0
      %487 = vmatprep.subr.bf16.mxu0 0
      %488 = vmatpush2.bf16.msra.mxu0 0
      %489 = vmatprep.subr.bf16.mxu0 0
      %490 = vmatpush2.bf16.msra.mxu0 0
      %491 = vmatprep.subr.bf16.mxu0 0
      %492 = vmatpush2.bf16.msra.mxu0 0
      %493 = vmatprep.subr.bf16.mxu0 0
      %494 = vmatpush2.bf16.msra.mxu0 0
      %495 = vmatprep.subr.bf16.mxu0 0
      %496 = vmatpush2.bf16.msra.mxu0 0
      %497 = vmatprep.subr.bf16.mxu0 0
      %498 = vmatpush2.bf16.msra.mxu0 0
      %499 = vmatprep.subr.bf16.mxu0 0
      %500 = vmatpush2.bf16.msra.mxu0 0
      %501 = vmatprep.mubr.bf16.mxu0 0
      %502 = vmatmul.mubr.bf16.gmra.mxu0 %v455
      %v503 = vpop.f32.mrf.mxu0
      %v504 = vadd.f32 %v407, %v503
      %v505 = vpop.f32.mrf.mxu0
      %v506 = vadd.f32 %v409, %v505
      %v507 = vpop.f32.mrf.mxu0
      %v508 = vpop.f32.mrf.mxu0
      %509 = vdwg.mxu0
      %510 = vmatprep.subr.bf16.mxu0 0
      %511 = vmatpush1.bf16.msra.mxu0 0
      %512 = vmatprep.subr.bf16.mxu0 0
      %513 = vmatpush1.bf16.msra.mxu0 0
      %514 = vmatprep.subr.bf16.mxu0 0
      %515 = vmatpush1.bf16.msra.mxu0 0
      %516 = vmatprep.subr.bf16.mxu0 0
      %517 = vmatpush1.bf16.msra.mxu0 0
      %518 = vmatprep.subr.bf16.mxu0 0
      %519 = vmatpush1.bf16.msra.mxu0 0
      %520 = vmatprep.subr.bf16.mxu0 0
      %521 = vmatpush1.bf16.msra.mxu0 0
      %522 = vmatprep.subr.bf16.mxu0 0
      %523 = vmatpush1.bf16.msra.mxu0 0
      %524 = vmatprep.subr.bf16.mxu0 %v467
      %525 = vmatpush1.bf16.msra.mxu0 %v464
      %526 = vmatprep.subr.bf16.mxu0 0
      %527 = vmatpush2.bf16.msra.mxu0 0
      %528 = vmatprep.subr.bf16.mxu0 0
      %529 = vmatpush2.bf16.msra.mxu0 0
      %530 = vmatprep.subr.bf16.mxu0 0
      %531 = vmatpush2.bf16.msra.mxu0 0
      %532 = vmatprep.subr.bf16.mxu0 0
      %533 = vmatpush2.bf16.msra.mxu0 0
      %534 = vmatprep.subr.bf16.mxu0 0
      %535 = vmatpush2.bf16.msra.mxu0 0
      %536 = vmatprep.subr.bf16.mxu0 0
      %537 = vmatpush2.bf16.msra.mxu0 0
      %538 = vmatprep.subr.bf16.mxu0 0
      %539 = vmatpush2.bf16.msra.mxu0 0
      %540 = vmatprep.subr.bf16.mxu0 0
      %541 = vmatpush2.bf16.msra.mxu0 0
      %542 = vmatprep.mubr.bf16.mxu0 0
      %543 = vmatmul.mubr.bf16.gmra.mxu0 %v455
      %v544 = vpop.f32.mrf.mxu0
      %v545 = vadd.f32 %v448, %v544
      %v546 = vpop.f32.mrf.mxu0
      %v547 = vadd.f32 %v450, %v546
      %v548 = vpop.f32.mrf.mxu0
      %v549 = vpop.f32.mrf.mxu0
      %550 = vdwg.mxu0
      %551 = vrot.lane.b32.xlu0 %v320, 126
      %v552 = vpop.permute.xlu0 %551
      %553 = vrot.lane.b32.xlu0 %v328, 126
      %v554 = vpop.permute.xlu0 %553
      %555 = vrot.lane.b32.xlu0 %v327, 126
      %v556 = vpop.permute.xlu0 %555
      %557 = vrot.lane.b32.xlu0 %v329, 126
      %v558 = vpop.permute.xlu0 %557
      %559 = vrot.lane.b32.xlu0 %v311, 126
      %v560 = vpop.permute.xlu0 %559
      %vm561 = vcmask 1031168
      %v562 = vsel %vm561, %v552, %v554
      %v563 = vsel %vm561, %v554, %v556
      %v564 = vsel %vm561, %v556, %v558
      %v565 = vsel %vm561, %v558, %v560
      %v567 = vsel %vm355, %v332, 0
      %v570 = vsel %vm359, %v562, 0
      %v573 = vsel %vm359, %v563, 0
      %v576 = vsel %vm359, %v564, 0
      %v579 = vsel %vm359, %v565, 0
      %581 = vmatprep.subr.bf16.mxu0 0
      %582 = vmatpush1.bf16.msra.mxu0 0
      %583 = vmatprep.subr.bf16.mxu0 0
      %584 = vmatpush1.bf16.msra.mxu0 0
      %585 = vmatprep.subr.bf16.mxu0 0
      %586 = vmatpush1.bf16.msra.mxu0 0
      %587 = vmatprep.subr.bf16.mxu0 0
      %588 = vmatpush1.bf16.msra.mxu0 0
      %589 = vmatprep.subr.bf16.mxu0 0
      %590 = vmatpush1.bf16.msra.mxu0 0
      %591 = vmatprep.subr.bf16.mxu0 0
      %592 = vmatpush1.bf16.msra.mxu0 0
      %593 = vmatprep.subr.bf16.mxu0 0
      %594 = vmatpush1.bf16.msra.mxu0 0
      %595 = vmatprep.subr.bf16.mxu0 %v573
      %596 = vmatpush1.bf16.msra.mxu0 %v570
      %597 = vmatprep.subr.bf16.mxu0 0
      %598 = vmatpush2.bf16.msra.mxu0 0
      %599 = vmatprep.subr.bf16.mxu0 0
      %600 = vmatpush2.bf16.msra.mxu0 0
      %601 = vmatprep.subr.bf16.mxu0 0
      %602 = vmatpush2.bf16.msra.mxu0 0
      %603 = vmatprep.subr.bf16.mxu0 0
      %604 = vmatpush2.bf16.msra.mxu0 0
      %605 = vmatprep.subr.bf16.mxu0 0
      %606 = vmatpush2.bf16.msra.mxu0 0
      %607 = vmatprep.subr.bf16.mxu0 0
      %608 = vmatpush2.bf16.msra.mxu0 0
      %609 = vmatprep.subr.bf16.mxu0 0
      %610 = vmatpush2.bf16.msra.mxu0 0
      %611 = vmatprep.subr.bf16.mxu0 0
      %612 = vmatpush2.bf16.msra.mxu0 0
      %613 = vmatprep.mubr.bf16.mxu0 0
      %614 = vmatmul.mubr.bf16.gmra.mxu0 %v567
      %v615 = vpop.f32.mrf.mxu0
      %v616 = vadd.f32 0.0, %v615
      %v617 = vpop.f32.mrf.mxu0
      %v618 = vadd.f32 0.0, %v617
      %v619 = vpop.f32.mrf.mxu0
      %v620 = vpop.f32.mrf.mxu0
      %621 = vdwg.mxu0
      %622 = vmatprep.subr.bf16.mxu0 0
      %623 = vmatpush1.bf16.msra.mxu0 0
      %624 = vmatprep.subr.bf16.mxu0 0
      %625 = vmatpush1.bf16.msra.mxu0 0
      %626 = vmatprep.subr.bf16.mxu0 0
      %627 = vmatpush1.bf16.msra.mxu0 0
      %628 = vmatprep.subr.bf16.mxu0 0
      %629 = vmatpush1.bf16.msra.mxu0 0
      %630 = vmatprep.subr.bf16.mxu0 0
      %631 = vmatpush1.bf16.msra.mxu0 0
      %632 = vmatprep.subr.bf16.mxu0 0
      %633 = vmatpush1.bf16.msra.mxu0 0
      %634 = vmatprep.subr.bf16.mxu0 0
      %635 = vmatpush1.bf16.msra.mxu0 0
      %636 = vmatprep.subr.bf16.mxu0 %v579
      %637 = vmatpush1.bf16.msra.mxu0 %v576
      %638 = vmatprep.subr.bf16.mxu0 0
      %639 = vmatpush2.bf16.msra.mxu0 0
      %640 = vmatprep.subr.bf16.mxu0 0
      %641 = vmatpush2.bf16.msra.mxu0 0
      %642 = vmatprep.subr.bf16.mxu0 0
      %643 = vmatpush2.bf16.msra.mxu0 0
      %644 = vmatprep.subr.bf16.mxu0 0
      %645 = vmatpush2.bf16.msra.mxu0 0
      %646 = vmatprep.subr.bf16.mxu0 0
      %647 = vmatpush2.bf16.msra.mxu0 0
      %648 = vmatprep.subr.bf16.mxu0 0
      %649 = vmatpush2.bf16.msra.mxu0 0
      %650 = vmatprep.subr.bf16.mxu0 0
      %651 = vmatpush2.bf16.msra.mxu0 0
      %652 = vmatprep.subr.bf16.mxu0 0
      %653 = vmatpush2.bf16.msra.mxu0 0
      %654 = vmatprep.mubr.bf16.mxu0 0
      %655 = vmatmul.mubr.bf16.gmra.mxu0 %v567
      %v656 = vpop.f32.mrf.mxu0
      %v657 = vadd.f32 0.0, %v656
      %v658 = vpop.f32.mrf.mxu0
      %v659 = vadd.f32 0.0, %v658
      %v660 = vpop.f32.mrf.mxu0
      %v661 = vpop.f32.mrf.mxu0
      %662 = vdwg.mxu0
      %v663 = vadd.f32 %v504, %v616
      %v664 = vadd.f32 %v506, %v618
      %v665 = vadd.f32 %v545, %v657
      %v666 = vadd.f32 %v547, %v659
      %667 = vrot.lane.b32.xlu0 %v320, 110
      %v668 = vpop.permute.xlu0 %667
      %669 = vrot.lane.b32.xlu0 %v328, 110
      %v670 = vpop.permute.xlu0 %669
      %671 = vrot.lane.b32.xlu0 %v327, 110
      %v672 = vpop.permute.xlu0 %671
      %673 = vrot.lane.b32.xlu0 %v329, 110
      %v674 = vpop.permute.xlu0 %673
      %675 = vrot.lane.b32.xlu0 %v311, 110
      %v676 = vpop.permute.xlu0 %675
      %vm677 = vcmask 900096
      %v678 = vsel %vm677, %v668, %v670
      %v679 = vsel %vm677, %v670, %v672
      %v680 = vsel %vm677, %v672, %v674
      %v681 = vsel %vm677, %v674, %v676
      %v683 = vsel %vm355, %v333, 0
      %v686 = vsel %vm359, %v678, 0
      %v689 = vsel %vm359, %v679, 0
      %v692 = vsel %vm359, %v680, 0
      %v695 = vsel %vm359, %v681, 0
      %697 = vmatprep.subr.bf16.mxu0 0
      %698 = vmatpush1.bf16.msra.mxu0 0
      %699 = vmatprep.subr.bf16.mxu0 0
      %700 = vmatpush1.bf16.msra.mxu0 0
      %701 = vmatprep.subr.bf16.mxu0 0
      %702 = vmatpush1.bf16.msra.mxu0 0
      %703 = vmatprep.subr.bf16.mxu0 0
      %704 = vmatpush1.bf16.msra.mxu0 0
      %705 = vmatprep.subr.bf16.mxu0 0
      %706 = vmatpush1.bf16.msra.mxu0 0
      %707 = vmatprep.subr.bf16.mxu0 0
      %708 = vmatpush1.bf16.msra.mxu0 0
      %709 = vmatprep.subr.bf16.mxu0 0
      %710 = vmatpush1.bf16.msra.mxu0 0
      %711 = vmatprep.subr.bf16.mxu0 %v689
      %712 = vmatpush1.bf16.msra.mxu0 %v686
      %713 = vmatprep.subr.bf16.mxu0 0
      %714 = vmatpush2.bf16.msra.mxu0 0
      %715 = vmatprep.subr.bf16.mxu0 0
      %716 = vmatpush2.bf16.msra.mxu0 0
      %717 = vmatprep.subr.bf16.mxu0 0
      %718 = vmatpush2.bf16.msra.mxu0 0
      %719 = vmatprep.subr.bf16.mxu0 0
      %720 = vmatpush2.bf16.msra.mxu0 0
      %721 = vmatprep.subr.bf16.mxu0 0
      %722 = vmatpush2.bf16.msra.mxu0 0
      %723 = vmatprep.subr.bf16.mxu0 0
      %724 = vmatpush2.bf16.msra.mxu0 0
      %725 = vmatprep.subr.bf16.mxu0 0
      %726 = vmatpush2.bf16.msra.mxu0 0
      %727 = vmatprep.subr.bf16.mxu0 0
      %728 = vmatpush2.bf16.msra.mxu0 0
      %729 = vmatprep.mubr.bf16.mxu0 0
      %730 = vmatmul.mubr.bf16.gmra.mxu0 %v683
      %v731 = vpop.f32.mrf.mxu0
      %v732 = vadd.f32 0.0, %v731
      %v733 = vpop.f32.mrf.mxu0
      %v734 = vadd.f32 0.0, %v733
      %v735 = vpop.f32.mrf.mxu0
      %v736 = vpop.f32.mrf.mxu0
      %737 = vdwg.mxu0
      %738 = vmatprep.subr.bf16.mxu0 0
      %739 = vmatpush1.bf16.msra.mxu0 0
      %740 = vmatprep.subr.bf16.mxu0 0
      %741 = vmatpush1.bf16.msra.mxu0 0
      %742 = vmatprep.subr.bf16.mxu0 0
      %743 = vmatpush1.bf16.msra.mxu0 0
      %744 = vmatprep.subr.bf16.mxu0 0
      %745 = vmatpush1.bf16.msra.mxu0 0
      %746 = vmatprep.subr.bf16.mxu0 0
      %747 = vmatpush1.bf16.msra.mxu0 0
      %748 = vmatprep.subr.bf16.mxu0 0
      %749 = vmatpush1.bf16.msra.mxu0 0
      %750 = vmatprep.subr.bf16.mxu0 0
      %751 = vmatpush1.bf16.msra.mxu0 0
      %752 = vmatprep.subr.bf16.mxu0 %v695
      %753 = vmatpush1.bf16.msra.mxu0 %v692
      %754 = vmatprep.subr.bf16.mxu0 0
      %755 = vmatpush2.bf16.msra.mxu0 0
      %756 = vmatprep.subr.bf16.mxu0 0
      %757 = vmatpush2.bf16.msra.mxu0 0
      %758 = vmatprep.subr.bf16.mxu0 0
      %759 = vmatpush2.bf16.msra.mxu0 0
      %760 = vmatprep.subr.bf16.mxu0 0
      %761 = vmatpush2.bf16.msra.mxu0 0
      %762 = vmatprep.subr.bf16.mxu0 0
      %763 = vmatpush2.bf16.msra.mxu0 0
      %764 = vmatprep.subr.bf16.mxu0 0
      %765 = vmatpush2.bf16.msra.mxu0 0
      %766 = vmatprep.subr.bf16.mxu0 0
      %767 = vmatpush2.bf16.msra.mxu0 0
      %768 = vmatprep.subr.bf16.mxu0 0
      %769 = vmatpush2.bf16.msra.mxu0 0
      %770 = vmatprep.mubr.bf16.mxu0 0
      %771 = vmatmul.mubr.bf16.gmra.mxu0 %v683
      %v772 = vpop.f32.mrf.mxu0
      %v773 = vadd.f32 0.0, %v772
      %v774 = vpop.f32.mrf.mxu0
      %v775 = vadd.f32 0.0, %v774
      %v776 = vpop.f32.mrf.mxu0
      %v777 = vpop.f32.mrf.mxu0
      %778 = vdwg.mxu0
      %v779 = vadd.f32 %v663, %v732
      %v780 = vadd.f32 %v664, %v734
      %v781 = vadd.f32 %v665, %v773
      %v782 = vadd.f32 %v666, %v775
      %783 = vrot.lane.b32.xlu0 %v320, 109
      %v784 = vpop.permute.xlu0 %783
      %785 = vrot.lane.b32.xlu0 %v328, 109
      %v786 = vpop.permute.xlu0 %785
      %787 = vrot.lane.b32.xlu0 %v327, 109
      %v788 = vpop.permute.xlu0 %787
      %789 = vrot.lane.b32.xlu0 %v329, 109
      %v790 = vpop.permute.xlu0 %789
      %791 = vrot.lane.b32.xlu0 %v311, 109
      %v792 = vpop.permute.xlu0 %791
      %vm793 = vcmask 891904
      %v794 = vsel %vm793, %v784, %v786
      %v795 = vsel %vm793, %v786, %v788
      %v796 = vsel %vm793, %v788, %v790
      %v797 = vsel %vm793, %v790, %v792
      %v799 = vsel %vm355, %v334, 0
      %v802 = vsel %vm359, %v794, 0
      %v805 = vsel %vm359, %v795, 0
      %v808 = vsel %vm359, %v796, 0
      %v811 = vsel %vm359, %v797, 0
      %813 = vmatprep.subr.bf16.mxu0 0
      %814 = vmatpush1.bf16.msra.mxu0 0
      %815 = vmatprep.subr.bf16.mxu0 0
      %816 = vmatpush1.bf16.msra.mxu0 0
      %817 = vmatprep.subr.bf16.mxu0 0
      %818 = vmatpush1.bf16.msra.mxu0 0
      %819 = vmatprep.subr.bf16.mxu0 0
      %820 = vmatpush1.bf16.msra.mxu0 0
      %821 = vmatprep.subr.bf16.mxu0 0
      %822 = vmatpush1.bf16.msra.mxu0 0
      %823 = vmatprep.subr.bf16.mxu0 0
      %824 = vmatpush1.bf16.msra.mxu0 0
      %825 = vmatprep.subr.bf16.mxu0 0
      %826 = vmatpush1.bf16.msra.mxu0 0
      %827 = vmatprep.subr.bf16.mxu0 %v805
      %828 = vmatpush1.bf16.msra.mxu0 %v802
      %829 = vmatprep.subr.bf16.mxu0 0
      %830 = vmatpush2.bf16.msra.mxu0 0
      %831 = vmatprep.subr.bf16.mxu0 0
      %832 = vmatpush2.bf16.msra.mxu0 0
      %833 = vmatprep.subr.bf16.mxu0 0
      %834 = vmatpush2.bf16.msra.mxu0 0
      %835 = vmatprep.subr.bf16.mxu0 0
      %836 = vmatpush2.bf16.msra.mxu0 0
      %837 = vmatprep.subr.bf16.mxu0 0
      %838 = vmatpush2.bf16.msra.mxu0 0
      %839 = vmatprep.subr.bf16.mxu0 0
      %840 = vmatpush2.bf16.msra.mxu0 0
      %841 = vmatprep.subr.bf16.mxu0 0
      %842 = vmatpush2.bf16.msra.mxu0 0
      %843 = vmatprep.subr.bf16.mxu0 0
      %844 = vmatpush2.bf16.msra.mxu0 0
      %845 = vmatprep.mubr.bf16.mxu0 0
      %846 = vmatmul.mubr.bf16.gmra.mxu0 %v799
      %v847 = vpop.f32.mrf.mxu0
      %v848 = vadd.f32 0.0, %v847
      %v849 = vpop.f32.mrf.mxu0
      %v850 = vadd.f32 0.0, %v849
      %v851 = vpop.f32.mrf.mxu0
      %v852 = vpop.f32.mrf.mxu0
      %853 = vdwg.mxu0
      %854 = vmatprep.subr.bf16.mxu0 0
      %855 = vmatpush1.bf16.msra.mxu0 0
      %856 = vmatprep.subr.bf16.mxu0 0
      %857 = vmatpush1.bf16.msra.mxu0 0
      %858 = vmatprep.subr.bf16.mxu0 0
      %859 = vmatpush1.bf16.msra.mxu0 0
      %860 = vmatprep.subr.bf16.mxu0 0
      %861 = vmatpush1.bf16.msra.mxu0 0
      %862 = vmatprep.subr.bf16.mxu0 0
      %863 = vmatpush1.bf16.msra.mxu0 0
      %864 = vmatprep.subr.bf16.mxu0 0
      %865 = vmatpush1.bf16.msra.mxu0 0
      %866 = vmatprep.subr.bf16.mxu0 0
      %867 = vmatpush1.bf16.msra.mxu0 0
      %868 = vmatprep.subr.bf16.mxu0 %v811
      %869 = vmatpush1.bf16.msra.mxu0 %v808
      %870 = vmatprep.subr.bf16.mxu0 0
      %871 = vmatpush2.bf16.msra.mxu0 0
      %872 = vmatprep.subr.bf16.mxu0 0
      %873 = vmatpush2.bf16.msra.mxu0 0
      %874 = vmatprep.subr.bf16.mxu0 0
      %875 = vmatpush2.bf16.msra.mxu0 0
      %876 = vmatprep.subr.bf16.mxu0 0
      %877 = vmatpush2.bf16.msra.mxu0 0
      %878 = vmatprep.subr.bf16.mxu0 0
      %879 = vmatpush2.bf16.msra.mxu0 0
      %880 = vmatprep.subr.bf16.mxu0 0
      %881 = vmatpush2.bf16.msra.mxu0 0
      %882 = vmatprep.subr.bf16.mxu0 0
      %883 = vmatpush2.bf16.msra.mxu0 0
      %884 = vmatprep.subr.bf16.mxu0 0
      %885 = vmatpush2.bf16.msra.mxu0 0
      %886 = vmatprep.mubr.bf16.mxu0 0
      %887 = vmatmul.mubr.bf16.gmra.mxu0 %v799
      %v888 = vpop.f32.mrf.mxu0
      %v889 = vadd.f32 0.0, %v888
      %v890 = vpop.f32.mrf.mxu0
      %v891 = vadd.f32 0.0, %v890
      %v892 = vpop.f32.mrf.mxu0
      %v893 = vpop.f32.mrf.mxu0
      %894 = vdwg.mxu0
      %v895 = vadd.f32 %v779, %v848
      %v896 = vadd.f32 %v780, %v850
      %v897 = vadd.f32 %v781, %v889
      %v898 = vadd.f32 %v782, %v891
      %899 = vrot.lane.b32.xlu0 %v320, 108
      %v900 = vpop.permute.xlu0 %899
      %901 = vrot.lane.b32.xlu0 %v328, 108
      %v902 = vpop.permute.xlu0 %901
      %903 = vrot.lane.b32.xlu0 %v327, 108
      %v904 = vpop.permute.xlu0 %903
      %905 = vrot.lane.b32.xlu0 %v329, 108
      %v906 = vpop.permute.xlu0 %905
      %907 = vrot.lane.b32.xlu0 %v311, 108
      %v908 = vpop.permute.xlu0 %907
      %vm909 = vcmask 883712
      %v910 = vsel %vm909, %v900, %v902
      %v911 = vsel %vm909, %v902, %v904
      %v912 = vsel %vm909, %v904, %v906
      %v913 = vsel %vm909, %v906, %v908
      %v915 = vsel %vm355, %v335, 0
      %v918 = vsel %vm359, %v910, 0
      %v921 = vsel %vm359, %v911, 0
      %v924 = vsel %vm359, %v912, 0
      %v927 = vsel %vm359, %v913, 0
      %929 = vmatprep.subr.bf16.mxu0 0
      %930 = vmatpush1.bf16.msra.mxu0 0
      %931 = vmatprep.subr.bf16.mxu0 0
      %932 = vmatpush1.bf16.msra.mxu0 0
      %933 = vmatprep.subr.bf16.mxu0 0
      %934 = vmatpush1.bf16.msra.mxu0 0
      %935 = vmatprep.subr.bf16.mxu0 0
      %936 = vmatpush1.bf16.msra.mxu0 0
      %937 = vmatprep.subr.bf16.mxu0 0
      %938 = vmatpush1.bf16.msra.mxu0 0
      %939 = vmatprep.subr.bf16.mxu0 0
      %940 = vmatpush1.bf16.msra.mxu0 0
      %941 = vmatprep.subr.bf16.mxu0 0
      %942 = vmatpush1.bf16.msra.mxu0 0
      %943 = vmatprep.subr.bf16.mxu0 %v921
      %944 = vmatpush1.bf16.msra.mxu0 %v918
      %945 = vmatprep.subr.bf16.mxu0 0
      %946 = vmatpush2.bf16.msra.mxu0 0
      %947 = vmatprep.subr.bf16.mxu0 0
      %948 = vmatpush2.bf16.msra.mxu0 0
      %949 = vmatprep.subr.bf16.mxu0 0
      %950 = vmatpush2.bf16.msra.mxu0 0
      %951 = vmatprep.subr.bf16.mxu0 0
      %952 = vmatpush2.bf16.msra.mxu0 0
      %953 = vmatprep.subr.bf16.mxu0 0
      %954 = vmatpush2.bf16.msra.mxu0 0
      %955 = vmatprep.subr.bf16.mxu0 0
      %956 = vmatpush2.bf16.msra.mxu0 0
      %957 = vmatprep.subr.bf16.mxu0 0
      %958 = vmatpush2.bf16.msra.mxu0 0
      %959 = vmatprep.subr.bf16.mxu0 0
      %960 = vmatpush2.bf16.msra.mxu0 0
      %961 = vmatprep.mubr.bf16.mxu0 0
      %962 = vmatmul.mubr.bf16.gmra.mxu0 %v915
      %v963 = vpop.f32.mrf.mxu0
      %v964 = vadd.f32 0.0, %v963
      %v965 = vpop.f32.mrf.mxu0
      %v966 = vadd.f32 0.0, %v965
      %v967 = vpop.f32.mrf.mxu0
      %v968 = vpop.f32.mrf.mxu0
      %969 = vdwg.mxu0
      %970 = vmatprep.subr.bf16.mxu0 0
      %971 = vmatpush1.bf16.msra.mxu0 0
      %972 = vmatprep.subr.bf16.mxu0 0
      %973 = vmatpush1.bf16.msra.mxu0 0
      %974 = vmatprep.subr.bf16.mxu0 0
      %975 = vmatpush1.bf16.msra.mxu0 0
      %976 = vmatprep.subr.bf16.mxu0 0
      %977 = vmatpush1.bf16.msra.mxu0 0
      %978 = vmatprep.subr.bf16.mxu0 0
      %979 = vmatpush1.bf16.msra.mxu0 0
      %980 = vmatprep.subr.bf16.mxu0 0
      %981 = vmatpush1.bf16.msra.mxu0 0
      %982 = vmatprep.subr.bf16.mxu0 0
      %983 = vmatpush1.bf16.msra.mxu0 0
      %984 = vmatprep.subr.bf16.mxu0 %v927
      %985 = vmatpush1.bf16.msra.mxu0 %v924
      %986 = vmatprep.subr.bf16.mxu0 0
      %987 = vmatpush2.bf16.msra.mxu0 0
      %988 = vmatprep.subr.bf16.mxu0 0
      %989 = vmatpush2.bf16.msra.mxu0 0
      %990 = vmatprep.subr.bf16.mxu0 0
      %991 = vmatpush2.bf16.msra.mxu0 0
      %992 = vmatprep.subr.bf16.mxu0 0
      %993 = vmatpush2.bf16.msra.mxu0 0
      %994 = vmatprep.subr.bf16.mxu0 0
      %995 = vmatpush2.bf16.msra.mxu0 0
      %996 = vmatprep.subr.bf16.mxu0 0
      %997 = vmatpush2.bf16.msra.mxu0 0
      %998 = vmatprep.subr.bf16.mxu0 0
      %999 = vmatpush2.bf16.msra.mxu0 0
      %1000 = vmatprep.subr.bf16.mxu0 0
      %1001 = vmatpush2.bf16.msra.mxu0 0
      %1002 = vmatprep.mubr.bf16.mxu0 0
      %1003 = vmatmul.mubr.bf16.gmra.mxu0 %v915
      %v1004 = vpop.f32.mrf.mxu0
      %v1005 = vadd.f32 0.0, %v1004
      %v1006 = vpop.f32.mrf.mxu0
      %v1007 = vadd.f32 0.0, %v1006
      %v1008 = vpop.f32.mrf.mxu0
      %v1009 = vpop.f32.mrf.mxu0
      %1010 = vdwg.mxu0
      %v1011 = vadd.f32 %v895, %v964
      %v1012 = vadd.f32 %v896, %v966
      %v1013 = vadd.f32 %v897, %v1005
      %v1014 = vadd.f32 %v898, %v1007
      %1015 = vrot.lane.b32.xlu0 %v320, 92
      %v1016 = vpop.permute.xlu0 %1015
      %1017 = vrot.lane.b32.xlu0 %v328, 92
      %v1018 = vpop.permute.xlu0 %1017
      %1019 = vrot.lane.b32.xlu0 %v327, 92
      %v1020 = vpop.permute.xlu0 %1019
      %1021 = vrot.lane.b32.xlu0 %v329, 92
      %v1022 = vpop.permute.xlu0 %1021
      %1023 = vrot.lane.b32.xlu0 %v311, 92
      %v1024 = vpop.permute.xlu0 %1023
      %vm1025 = vcmask 752640
      %v1026 = vsel %vm1025, %v1016, %v1018
      %v1027 = vsel %vm1025, %v1018, %v1020
      %v1028 = vsel %vm1025, %v1020, %v1022
      %v1029 = vsel %vm1025, %v1022, %v1024
      %v1031 = vsel %vm355, %v336, 0
      %v1034 = vsel %vm359, %v1026, 0
      %v1037 = vsel %vm359, %v1027, 0
      %v1040 = vsel %vm359, %v1028, 0
      %v1043 = vsel %vm359, %v1029, 0
      %1045 = vmatprep.subr.bf16.mxu0 0
      %1046 = vmatpush1.bf16.msra.mxu0 0
      %1047 = vmatprep.subr.bf16.mxu0 0
      %1048 = vmatpush1.bf16.msra.mxu0 0
      %1049 = vmatprep.subr.bf16.mxu0 0
      %1050 = vmatpush1.bf16.msra.mxu0 0
      %1051 = vmatprep.subr.bf16.mxu0 0
      %1052 = vmatpush1.bf16.msra.mxu0 0
      %1053 = vmatprep.subr.bf16.mxu0 0
      %1054 = vmatpush1.bf16.msra.mxu0 0
      %1055 = vmatprep.subr.bf16.mxu0 0
      %1056 = vmatpush1.bf16.msra.mxu0 0
      %1057 = vmatprep.subr.bf16.mxu0 0
      %1058 = vmatpush1.bf16.msra.mxu0 0
      %1059 = vmatprep.subr.bf16.mxu0 %v1037
      %1060 = vmatpush1.bf16.msra.mxu0 %v1034
      %1061 = vmatprep.subr.bf16.mxu0 0
      %1062 = vmatpush2.bf16.msra.mxu0 0
      %1063 = vmatprep.subr.bf16.mxu0 0
      %1064 = vmatpush2.bf16.msra.mxu0 0
      %1065 = vmatprep.subr.bf16.mxu0 0
      %1066 = vmatpush2.bf16.msra.mxu0 0
      %1067 = vmatprep.subr.bf16.mxu0 0
      %1068 = vmatpush2.bf16.msra.mxu0 0
      %1069 = vmatprep.subr.bf16.mxu0 0
      %1070 = vmatpush2.bf16.msra.mxu0 0
      %1071 = vmatprep.subr.bf16.mxu0 0
      %1072 = vmatpush2.bf16.msra.mxu0 0
      %1073 = vmatprep.subr.bf16.mxu0 0
      %1074 = vmatpush2.bf16.msra.mxu0 0
      %1075 = vmatprep.subr.bf16.mxu0 0
      %1076 = vmatpush2.bf16.msra.mxu0 0
      %1077 = vmatprep.mubr.bf16.mxu0 0
      %1078 = vmatmul.mubr.bf16.gmra.mxu0 %v1031
      %v1079 = vpop.f32.mrf.mxu0
      %v1080 = vadd.f32 0.0, %v1079
      %v1081 = vpop.f32.mrf.mxu0
      %v1082 = vadd.f32 0.0, %v1081
      %v1083 = vpop.f32.mrf.mxu0
      %v1084 = vpop.f32.mrf.mxu0
      %1085 = vdwg.mxu0
      %1086 = vmatprep.subr.bf16.mxu0 0
      %1087 = vmatpush1.bf16.msra.mxu0 0
      %1088 = vmatprep.subr.bf16.mxu0 0
      %1089 = vmatpush1.bf16.msra.mxu0 0
      %1090 = vmatprep.subr.bf16.mxu0 0
      %1091 = vmatpush1.bf16.msra.mxu0 0
      %1092 = vmatprep.subr.bf16.mxu0 0
      %1093 = vmatpush1.bf16.msra.mxu0 0
      %1094 = vmatprep.subr.bf16.mxu0 0
      %1095 = vmatpush1.bf16.msra.mxu0 0
      %1096 = vmatprep.subr.bf16.mxu0 0
      %1097 = vmatpush1.bf16.msra.mxu0 0
      %1098 = vmatprep.subr.bf16.mxu0 0
      %1099 = vmatpush1.bf16.msra.mxu0 0
      %1100 = vmatprep.subr.bf16.mxu0 %v1043
      %1101 = vmatpush1.bf16.msra.mxu0 %v1040
      %1102 = vmatprep.subr.bf16.mxu0 0
      %1103 = vmatpush2.bf16.msra.mxu0 0
      %1104 = vmatprep.subr.bf16.mxu0 0
      %1105 = vmatpush2.bf16.msra.mxu0 0
      %1106 = vmatprep.subr.bf16.mxu0 0
      %1107 = vmatpush2.bf16.msra.mxu0 0
      %1108 = vmatprep.subr.bf16.mxu0 0
      %1109 = vmatpush2.bf16.msra.mxu0 0
      %1110 = vmatprep.subr.bf16.mxu0 0
      %1111 = vmatpush2.bf16.msra.mxu0 0
      %1112 = vmatprep.subr.bf16.mxu0 0
      %1113 = vmatpush2.bf16.msra.mxu0 0
      %1114 = vmatprep.subr.bf16.mxu0 0
      %1115 = vmatpush2.bf16.msra.mxu0 0
      %1116 = vmatprep.subr.bf16.mxu0 0
      %1117 = vmatpush2.bf16.msra.mxu0 0
      %1118 = vmatprep.mubr.bf16.mxu0 0
      %1119 = vmatmul.mubr.bf16.gmra.mxu0 %v1031
      %v1120 = vpop.f32.mrf.mxu0
      %v1121 = vadd.f32 0.0, %v1120
      %v1122 = vpop.f32.mrf.mxu0
      %v1123 = vadd.f32 0.0, %v1122
      %v1124 = vpop.f32.mrf.mxu0
      %v1125 = vpop.f32.mrf.mxu0
      %1126 = vdwg.mxu0
      %v1127 = vadd.f32 %v1011, %v1080
      %v1128 = vadd.f32 %v1012, %v1082
      %v1129 = vadd.f32 %v1013, %v1121
      %v1130 = vadd.f32 %v1014, %v1123
      %1131 = vrot.lane.b32.xlu0 %v320, 91
      %v1132 = vpop.permute.xlu0 %1131
      %1133 = vrot.lane.b32.xlu0 %v328, 91
      %v1134 = vpop.permute.xlu0 %1133
      %1135 = vrot.lane.b32.xlu0 %v327, 91
      %v1136 = vpop.permute.xlu0 %1135
      %1137 = vrot.lane.b32.xlu0 %v329, 91
      %v1138 = vpop.permute.xlu0 %1137
      %1139 = vrot.lane.b32.xlu0 %v311, 91
      %v1140 = vpop.permute.xlu0 %1139
      %vm1141 = vcmask 744448
      %v1142 = vsel %vm1141, %v1132, %v1134
      %v1143 = vsel %vm1141, %v1134, %v1136
      %v1144 = vsel %vm1141, %v1136, %v1138
      %v1145 = vsel %vm1141, %v1138, %v1140
      %v1147 = vsel %vm355, %v337, 0
      %v1150 = vsel %vm359, %v1142, 0
      %v1153 = vsel %vm359, %v1143, 0
      %v1156 = vsel %vm359, %v1144, 0
      %v1159 = vsel %vm359, %v1145, 0
      %1161 = vmatprep.subr.bf16.mxu0 0
      %1162 = vmatpush1.bf16.msra.mxu0 0
      %1163 = vmatprep.subr.bf16.mxu0 0
      %1164 = vmatpush1.bf16.msra.mxu0 0
      %1165 = vmatprep.subr.bf16.mxu0 0
      %1166 = vmatpush1.bf16.msra.mxu0 0
      %1167 = vmatprep.subr.bf16.mxu0 0
      %1168 = vmatpush1.bf16.msra.mxu0 0
      %1169 = vmatprep.subr.bf16.mxu0 0
      %1170 = vmatpush1.bf16.msra.mxu0 0
      %1171 = vmatprep.subr.bf16.mxu0 0
      %1172 = vmatpush1.bf16.msra.mxu0 0
      %1173 = vmatprep.subr.bf16.mxu0 0
      %1174 = vmatpush1.bf16.msra.mxu0 0
      %1175 = vmatprep.subr.bf16.mxu0 %v1153
      %1176 = vmatpush1.bf16.msra.mxu0 %v1150
      %1177 = vmatprep.subr.bf16.mxu0 0
      %1178 = vmatpush2.bf16.msra.mxu0 0
      %1179 = vmatprep.subr.bf16.mxu0 0
      %1180 = vmatpush2.bf16.msra.mxu0 0
      %1181 = vmatprep.subr.bf16.mxu0 0
      %1182 = vmatpush2.bf16.msra.mxu0 0
      %1183 = vmatprep.subr.bf16.mxu0 0
      %1184 = vmatpush2.bf16.msra.mxu0 0
      %1185 = vmatprep.subr.bf16.mxu0 0
      %1186 = vmatpush2.bf16.msra.mxu0 0
      %1187 = vmatprep.subr.bf16.mxu0 0
      %1188 = vmatpush2.bf16.msra.mxu0 0
      %1189 = vmatprep.subr.bf16.mxu0 0
      %1190 = vmatpush2.bf16.msra.mxu0 0
      %1191 = vmatprep.subr.bf16.mxu0 0
      %1192 = vmatpush2.bf16.msra.mxu0 0
      %1193 = vmatprep.mubr.bf16.mxu0 0
      %1194 = vmatmul.mubr.bf16.gmra.mxu0 %v1147
      %v1195 = vpop.f32.mrf.mxu0
      %v1196 = vadd.f32 0.0, %v1195
      %v1197 = vpop.f32.mrf.mxu0
      %v1198 = vadd.f32 0.0, %v1197
      %v1199 = vpop.f32.mrf.mxu0
      %v1200 = vpop.f32.mrf.mxu0
      %1201 = vdwg.mxu0
      %1202 = vmatprep.subr.bf16.mxu0 0
      %1203 = vmatpush1.bf16.msra.mxu0 0
      %1204 = vmatprep.subr.bf16.mxu0 0
      %1205 = vmatpush1.bf16.msra.mxu0 0
      %1206 = vmatprep.subr.bf16.mxu0 0
      %1207 = vmatpush1.bf16.msra.mxu0 0
      %1208 = vmatprep.subr.bf16.mxu0 0
      %1209 = vmatpush1.bf16.msra.mxu0 0
      %1210 = vmatprep.subr.bf16.mxu0 0
      %1211 = vmatpush1.bf16.msra.mxu0 0
      %1212 = vmatprep.subr.bf16.mxu0 0
      %1213 = vmatpush1.bf16.msra.mxu0 0
      %1214 = vmatprep.subr.bf16.mxu0 0
      %1215 = vmatpush1.bf16.msra.mxu0 0
      %1216 = vmatprep.subr.bf16.mxu0 %v1159
      %1217 = vmatpush1.bf16.msra.mxu0 %v1156
      %1218 = vmatprep.subr.bf16.mxu0 0
      %1219 = vmatpush2.bf16.msra.mxu0 0
      %1220 = vmatprep.subr.bf16.mxu0 0
      %1221 = vmatpush2.bf16.msra.mxu0 0
      %1222 = vmatprep.subr.bf16.mxu0 0
      %1223 = vmatpush2.bf16.msra.mxu0 0
      %1224 = vmatprep.subr.bf16.mxu0 0
      %1225 = vmatpush2.bf16.msra.mxu0 0
      %1226 = vmatprep.subr.bf16.mxu0 0
      %1227 = vmatpush2.bf16.msra.mxu0 0
      %1228 = vmatprep.subr.bf16.mxu0 0
      %1229 = vmatpush2.bf16.msra.mxu0 0
      %1230 = vmatprep.subr.bf16.mxu0 0
      %1231 = vmatpush2.bf16.msra.mxu0 0
      %1232 = vmatprep.subr.bf16.mxu0 0
      %1233 = vmatpush2.bf16.msra.mxu0 0
      %1234 = vmatprep.mubr.bf16.mxu0 0
      %1235 = vmatmul.mubr.bf16.gmra.mxu0 %v1147
      %v1236 = vpop.f32.mrf.mxu0
      %v1237 = vadd.f32 0.0, %v1236
      %v1238 = vpop.f32.mrf.mxu0
      %v1239 = vadd.f32 0.0, %v1238
      %v1240 = vpop.f32.mrf.mxu0
      %v1241 = vpop.f32.mrf.mxu0
      %1242 = vdwg.mxu0
      %v1243 = vadd.f32 %v1127, %v1196
      %v1244 = vadd.f32 %v1128, %v1198
      %v1245 = vadd.f32 %v1129, %v1237
      %v1246 = vadd.f32 %v1130, %v1239
      %1247 = vrot.lane.b32.xlu0 %v320, 90
      %v1248 = vpop.permute.xlu0 %1247
      %1249 = vrot.lane.b32.xlu0 %v328, 90
      %v1250 = vpop.permute.xlu0 %1249
      %1251 = vrot.lane.b32.xlu0 %v327, 90
      %v1252 = vpop.permute.xlu0 %1251
      %1253 = vrot.lane.b32.xlu0 %v329, 90
      %v1254 = vpop.permute.xlu0 %1253
      %1255 = vrot.lane.b32.xlu0 %v311, 90
      %v1256 = vpop.permute.xlu0 %1255
      %vm1257 = vcmask 736256
      %v1258 = vsel %vm1257, %v1248, %v1250
      %v1259 = vsel %vm1257, %v1250, %v1252
      %v1260 = vsel %vm1257, %v1252, %v1254
      %v1261 = vsel %vm1257, %v1254, %v1256
      %v1263 = vsel %vm355, %v338, 0
      %v1266 = vsel %vm359, %v1258, 0
      %v1269 = vsel %vm359, %v1259, 0
      %v1272 = vsel %vm359, %v1260, 0
      %v1275 = vsel %vm359, %v1261, 0
      %1277 = vmatprep.subr.bf16.mxu0 0
      %1278 = vmatpush1.bf16.msra.mxu0 0
      %1279 = vmatprep.subr.bf16.mxu0 0
      %1280 = vmatpush1.bf16.msra.mxu0 0
      %1281 = vmatprep.subr.bf16.mxu0 0
      %1282 = vmatpush1.bf16.msra.mxu0 0
      %1283 = vmatprep.subr.bf16.mxu0 0
      %1284 = vmatpush1.bf16.msra.mxu0 0
      %1285 = vmatprep.subr.bf16.mxu0 0
      %1286 = vmatpush1.bf16.msra.mxu0 0
      %1287 = vmatprep.subr.bf16.mxu0 0
      %1288 = vmatpush1.bf16.msra.mxu0 0
      %1289 = vmatprep.subr.bf16.mxu0 0
      %1290 = vmatpush1.bf16.msra.mxu0 0
      %1291 = vmatprep.subr.bf16.mxu0 %v1269
      %1292 = vmatpush1.bf16.msra.mxu0 %v1266
      %1293 = vmatprep.subr.bf16.mxu0 0
      %1294 = vmatpush2.bf16.msra.mxu0 0
      %1295 = vmatprep.subr.bf16.mxu0 0
      %1296 = vmatpush2.bf16.msra.mxu0 0
      %1297 = vmatprep.subr.bf16.mxu0 0
      %1298 = vmatpush2.bf16.msra.mxu0 0
      %1299 = vmatprep.subr.bf16.mxu0 0
      %1300 = vmatpush2.bf16.msra.mxu0 0
      %1301 = vmatprep.subr.bf16.mxu0 0
      %1302 = vmatpush2.bf16.msra.mxu0 0
      %1303 = vmatprep.subr.bf16.mxu0 0
      %1304 = vmatpush2.bf16.msra.mxu0 0
      %1305 = vmatprep.subr.bf16.mxu0 0
      %1306 = vmatpush2.bf16.msra.mxu0 0
      %1307 = vmatprep.subr.bf16.mxu0 0
      %1308 = vmatpush2.bf16.msra.mxu0 0
      %1309 = vmatprep.mubr.bf16.mxu0 0
      %1310 = vmatmul.mubr.bf16.gmra.mxu0 %v1263
      %v1311 = vpop.f32.mrf.mxu0
      %v1312 = vadd.f32 0.0, %v1311
      %v1313 = vpop.f32.mrf.mxu0
      %v1314 = vadd.f32 0.0, %v1313
      %v1315 = vpop.f32.mrf.mxu0
      %v1316 = vpop.f32.mrf.mxu0
      %1317 = vdwg.mxu0
      %1318 = vmatprep.subr.bf16.mxu0 0
      %1319 = vmatpush1.bf16.msra.mxu0 0
      %1320 = vmatprep.subr.bf16.mxu0 0
      %1321 = vmatpush1.bf16.msra.mxu0 0
      %1322 = vmatprep.subr.bf16.mxu0 0
      %1323 = vmatpush1.bf16.msra.mxu0 0
      %1324 = vmatprep.subr.bf16.mxu0 0
      %1325 = vmatpush1.bf16.msra.mxu0 0
      %1326 = vmatprep.subr.bf16.mxu0 0
      %1327 = vmatpush1.bf16.msra.mxu0 0
      %1328 = vmatprep.subr.bf16.mxu0 0
      %1329 = vmatpush1.bf16.msra.mxu0 0
      %1330 = vmatprep.subr.bf16.mxu0 0
      %1331 = vmatpush1.bf16.msra.mxu0 0
      %1332 = vmatprep.subr.bf16.mxu0 %v1275
      %1333 = vmatpush1.bf16.msra.mxu0 %v1272
      %1334 = vmatprep.subr.bf16.mxu0 0
      %1335 = vmatpush2.bf16.msra.mxu0 0
      %1336 = vmatprep.subr.bf16.mxu0 0
      %1337 = vmatpush2.bf16.msra.mxu0 0
      %1338 = vmatprep.subr.bf16.mxu0 0
      %1339 = vmatpush2.bf16.msra.mxu0 0
      %1340 = vmatprep.subr.bf16.mxu0 0
      %1341 = vmatpush2.bf16.msra.mxu0 0
      %1342 = vmatprep.subr.bf16.mxu0 0
      %1343 = vmatpush2.bf16.msra.mxu0 0
      %1344 = vmatprep.subr.bf16.mxu0 0
      %1345 = vmatpush2.bf16.msra.mxu0 0
      %1346 = vmatprep.subr.bf16.mxu0 0
      %1347 = vmatpush2.bf16.msra.mxu0 0
      %1348 = vmatprep.subr.bf16.mxu0 0
      %1349 = vmatpush2.bf16.msra.mxu0 0
      %1350 = vmatprep.mubr.bf16.mxu0 0
      %1351 = vmatmul.mubr.bf16.gmra.mxu0 %v1263
      %v1352 = vpop.f32.mrf.mxu0
      %v1353 = vadd.f32 0.0, %v1352
      %v1354 = vpop.f32.mrf.mxu0
      %v1355 = vadd.f32 0.0, %v1354
      %v1356 = vpop.f32.mrf.mxu0
      %v1357 = vpop.f32.mrf.mxu0
      %1358 = vdwg.mxu0
      %v1359 = vadd.f32 %v1243, %v1312
      %v1360 = vadd.f32 %v1244, %v1314
      %v1361 = vadd.f32 %v1245, %v1353
      %v1362 = vadd.f32 %v1246, %v1355
      %1363 = vst [vmem:[%s303] sm:$0xff] %v1359
      %1364 = vst [vmem:[%s303 + $0x8] sm:$0xff] %v1360
      %1365 = vst [vmem:[%s303 + $0x10] sm:$0xff] %v1361
      %1366 = vst [vmem:[%s303 + $0x18] sm:$0xff] %v1362
      %v1367 = vld [vmem:[%s297] sm:$0xf]
      %v1369 = vlaneseq
      %v1370 = vshrl.u32 %v1369, 7
      %v1371 = vsub.s32 0, %v1370
      %v1372 = vrot.slane %v1367, %v1371
      %v1373 = vlaneseq
      %v1374 = vshrl.u32 %v1373, 7
      %v1375 = vsub.s32 1, %v1374
      %v1376 = vrot.slane %v1367, %v1375
      %v1377 = vlaneseq
      %v1378 = vshrl.u32 %v1377, 7
      %v1379 = vsub.s32 2, %v1378
      %v1380 = vrot.slane %v1367, %v1379
      %v1381 = vlaneseq
      %v1382 = vshrl.u32 %v1381, 7
      %v1383 = vsub.s32 3, %v1382
      %v1384 = vrot.slane %v1367, %v1383
      %v1389 = vmul.f32 %v1359, %v1372
      %v1390 = vmul.f32 %v1360, %v1376
      %v1391 = vmul.f32 %v1361, %v1380
      %v1392 = vmul.f32 %v1362, %v1384
      %v1393 = vadd.f32 %v1389, %v1390
      %v1394 = vadd.f32 %v1393, %v1391
      %v1395 = vadd.f32 %v1394, %v1392
      %1396 = vadd.xlane.f32.xlu0 %v1395
      %v1397 = vpop.xlane.xlu0 %1396
      %v1398 = vmul.f32 %v1389, %v1359
      %v1399 = vmul.f32 %v1390, %v1360
      %v1400 = vmul.f32 %v1391, %v1361
      %v1401 = vmul.f32 %v1392, %v1362
      %v1402 = vadd.f32 %v1398, %v1399
      %v1403 = vadd.f32 %v1402, %v1400
      %v1404 = vadd.f32 %v1403, %v1401
      %1405 = vadd.xlane.f32.xlu0 %v1404
      %v1406 = vpop.xlane.xlu0 %1405
      %vm1407 = vcmask 7168
      %v1408 = vsel %vm1407, %v1397, %v1406
      %vm1409 = vcmask 15360
      %1410 = vst.msk [vmem:[%s308] sm:$0xff] %vm1409, %v1408
      %s1411 = smul.u32 4, %s17
      %p1412 = scmp.lt.s32.totalorder %s1411, 7
      %s1413 = scalar_select %p1412, %s1411, 7
      %s1414 = smul.addr %s1413, 8
      %s1415 = scalar_lea.vmem %s4, %s1414
      %p1416 = scmp.lt.s32.totalorder %s17, 1
      %s1417 = scalar_select %p1416, %s17, 1
      %s1418 = smul.addr %s1417, 8
      %s1419 = scalar_lea.vmem %s5, %s1418
      // Predicated region
      $region37: #{cb_forward.2} parent=35 // pred_check
        %p1420 = pneg %p138
      $region38: #{cb_forward.2} parent=35 // pred_check_branch
        %1422 = sbr.rel (%p1420) target = $region40
      $region39: #{cb_forward.2} parent=35 // pred_region
        %s1423 = smul.u32 4, %s17
      $region40: #{cb_forward.2} parent=35 // pred_fallthru
        _
      // Predicated region
      $region41: #{cb_forward.2} parent=35 // pred_check
        %p1424 = pneg %p164
      $region42: #{cb_forward.2} parent=35 // pred_check_branch
        %1426 = sbr.rel (%p1424) target = $region44
      $region43: #{cb_forward.2} parent=35 // pred_region
        _
      $region44: #{cb_forward.2} parent=35 // pred_fallthru
        _
    $region36: #{cb_forward.2} parent=5 // pred_fallthru
      _
    %p1427 = scmp.le.s32.totalorder 2, %s12
    // Predicated region
    $region45: #{cb_forward.2} parent=5 // pred_check
      %p1428 = pneg %p1427
    $region46: #{cb_forward.2} parent=5 // pred_check_branch
      %1430 = sbr.rel (%p1428) target = $region48
    $region47: #{cb_forward.2} parent=5 // pred_region
      %s1431 = ssub.s32 %s12, 2
      // Predicated region
      $region49: #{cb_forward.2} parent=47 // pred_check
        %p1432 = pneg %p144
      $region50: #{cb_forward.2} parent=47 // pred_check_branch
        %1434 = sbr.rel (%p1432) target = $region52
      $region51: #{cb_forward.2} parent=47 // pred_region
        %s1435 = smul.u32 4, %s18
        %p1436 = scmp.lt.s32.totalorder %s1435, 7
        %s1437 = scalar_select %p1436, %s1435, 7
        %s1438 = smul.addr %s1437, 8
        %s1439 = scalar_lea.vmem %s4, %s1438
      $region52: #{cb_forward.2} parent=47 // pred_fallthru
        _
      // Predicated region
      $region53: #{cb_forward.2} parent=47 // pred_check
        %p1440 = pneg %p170
      $region54: #{cb_forward.2} parent=47 // pred_check_branch
        %1442 = sbr.rel (%p1440) target = $region56
      $region55: #{cb_forward.2} parent=47 // pred_region
        %p1443 = scmp.lt.s32.totalorder %s18, 1
        %s1444 = scalar_select %p1443, %s18, 1
        %s1445 = smul.addr %s1444, 8
        %s1446 = scalar_lea.vmem %s5, %s1445
      $region56: #{cb_forward.2} parent=47 // pred_fallthru
        _
    $region48: #{cb_forward.2} parent=5 // pred_fallthru
      _
  $region6: #{cb_forward.2} parent=0 // loop_footer
    %s16 = sadd.s32 1, %s12
  $region7: #{cb_forward.2} parent=0 // loop_footer_branch
    %11 = sbr.rel target = $region3
  $region8: #{cb_forward.2} parent=0 // loop_exit
    _

</llo_original>
